<compile_context>
chip_gen: v5e
topology: v5e:2x2
jax: 0.10.0
libtpu: 0.0.40
codegen_flags: <defaults>
</compile_context>

<pallas_src>
import jax
import jax.numpy as jnp
from jax import lax
from jax.experimental import pallas as pl
from jax.experimental.pallas import tpu as pltpu

BN_EPS = 1e-5
_VMEM = pl.BlockSpec(memory_space=pltpu.MemorySpace.VMEM)


# ----------------------------------------------------------------------------
# One conv_layer block: Conv1d + BatchNorm1d (batch stats) + ReLU + MaxPool1d
# ----------------------------------------------------------------------------
def _conv_bn_relu_pool(buf_ref, x, w_ref, gamma_ref, beta_ref):
    # x: (N, L, Cin) value; w_ref: (3*Cin, Cout); gamma/beta: (1, 1, Cout)
    N, L, Cin = x.shape
    Cout = w_ref.shape[-1]
    L_out = (L - 1) // 2 + 1
    Cbuf = buf_ref.shape[-1]

    # ---- stage x into zero-padded scratch: rows 1..L hold x.
    # Row 0 is the shared left zero-pad (zeroed once in the kernel body and
    # never written afterwards); only the right pad row L+1 changes per layer.
    buf_ref[:, L + 1:L + 2, :] = jnp.zeros((N, 1, Cbuf), jnp.float32)
    buf_ref[:, 1:L + 1, 0:Cin] = x

    # ---- Conv1d on the VPU: y[n,l,co] = sum_{k,ci} x[n,l+k-1,ci] * w[k,ci,co]
    y = jnp.zeros((N, L, Cout), jnp.float32)
    for k in range(3):
        tap = buf_ref[:, k:k + L, 0:Cin]                        # (N, L, Cin), zero padded
        for ci in range(Cin):
            w_vec = w_ref[k * Cin + ci:k * Cin + ci + 1, :]     # (1, Cout)
            y = y + tap[:, :, ci:ci + 1] * w_vec                # lane-broadcast MAC

    # ---- BatchNorm1d (training-mode batch stats over (N, L), single pass) + ReLU
    s1 = jnp.sum(y, axis=1, keepdims=True)                      # (N, 1, Cout)
    s2 = jnp.sum(y * y, axis=1, keepdims=True)                  # (N, 1, Cout)
    t1, t2 = s1[0:1], s2[0:1]
    for n in range(1, N):                                       # tiny static batch reduce
        t1 = t1 + s1[n:n + 1]
        t2 = t2 + s2[n:n + 1]
    inv_cnt = 1.0 / float(N * L)
    mean = t1 * inv_cnt                                         # (1, 1, Cout)
    var = t2 * inv_cnt - mean * mean                            # biased variance
    scale = gamma_ref[...] * lax.rsqrt(var + BN_EPS)
    shift = beta_ref[...] - mean * scale
    y = jnp.maximum(y * scale + shift, 0.0)                     # ReLU fused

    # ---- MaxPool1d(kernel=3, stride=2, padding=1)
    # Post-ReLU values are >= 0, so zero padding == PyTorch's -inf padding here.
    # buf rows: row 0 = 0, rows 1..L = y, row L+1 = 0  =>  buf[l] = y[l-1].
    # out[j] = max(y[2j-1], y[2j], y[2j+1]) = max(buf[2j], buf[2j+1], buf[2j+2])
    # read directly as three stride-2 views (no intermediate write-back).
    buf_ref[:, 1:L + 1, 0:Cout] = y
    a = buf_ref[:, pl.ds(0, L_out, stride=2), 0:Cout]
    b = buf_ref[:, pl.ds(1, L_out, stride=2), 0:Cout]
    c = buf_ref[:, pl.ds(2, L_out, stride=2), 0:Cout]
    return jnp.maximum(jnp.maximum(a, b), c)


# ----------------------------------------------------------------------------
# Head: AdaptiveAvgPool1d(1) + pre-folded (Linear o Linear o Linear)
# ----------------------------------------------------------------------------
def _head(x, wf_ref, bf_ref, o_ref):
    # x: (N, L, C);  wf_ref: (label, C);  bf_ref: (label, 1);  o_ref: (N, 1, label)
    N, L, C = x.shape
    label = o_ref.shape[-1]
    xm = jnp.sum(x, axis=1, keepdims=True) * (1.0 / float(L))   # (N, 1, C)
    for o in range(label):
        w_row = wf_ref[o:o + 1, :]                              # (1, C)
        bias = bf_ref[o:o + 1, :]                               # (1, 1)
        val = jnp.sum(xm * w_row, axis=-1, keepdims=True) + bias  # (N, 1, 1)
        o_ref[:, :, o:o + 1] = val


def _make_kernel(num_conv_layers):
    def kernel(*refs):
        x_ref = refs[0]
        conv_refs = refs[1:1 + 3 * num_conv_layers]
        wf_ref, bf_ref, o_ref, buf_ref = refs[1 + 3 * num_conv_layers:]
        N, _, Cbuf = buf_ref.shape
        # Shared left zero-pad row for every layer's conv / pool windows;
        # zeroed exactly once (no later write ever touches row 0).
        buf_ref[:, 0:1, :] = jnp.zeros((N, 1, Cbuf), jnp.float32)
        x = x_ref[...]
        for i in range(num_conv_layers):
            w_ref, g_ref, b_ref = conv_refs[3 * i:3 * i + 3]
            x = _conv_bn_relu_pool(buf_ref, x, w_ref, g_ref, b_ref)
        _head(x, wf_ref, bf_ref, o_ref)
    return kernel


# ----------------------------------------------------------------------------
# Full forward (wrapper glue: layout transpose, weight reshapes, FC folding)
# ----------------------------------------------------------------------------
def call_predictor_forward(x_ncl, conv_ws, gammas, betas, fc_ws, fc_bs):
    # x_ncl: (N, Cin, L); conv_ws[i]: (3, Cin, Cout); gammas/betas[i]: (1, Cout)
    # fc_ws[i]: (in, out) (= torch weight.T); fc_bs[i]: (1, out)
    x = jnp.transpose(x_ncl, (0, 2, 1)).astype(jnp.float32)     # NCL -> NLC
    N, L0, Cin0 = x.shape

    conv_args = []
    c_max = Cin0
    for w, g, b in zip(conv_ws, gammas, betas):
        _, cin, cout = w.shape
        c_max = max(c_max, cout)
        conv_args += [w.astype(jnp.float32).reshape(3 * cin, cout),
                      g.astype(jnp.float32).reshape(1, 1, cout),
                      b.astype(jnp.float32).reshape(1, 1, cout)]

    # Fold the chained Linear layers (no nonlinearity between) into one affine.
    wf, bf = fc_ws[0], fc_bs[0]
    for w, b in zip(fc_ws[1:], fc_bs[1:]):
        wf = wf @ w
        bf = bf @ w + b
    label_size = wf.shape[-1]
    wf_t = jnp.transpose(wf).astype(jnp.float32)                # (label, C_last)
    bf_t = jnp.transpose(bf).astype(jnp.float32)                # (label, 1)

    n_in = 3 + 3 * len(conv_ws)
    out3d = pl.pallas_call(
        _make_kernel(len(conv_ws)),
        out_shape=jax.ShapeDtypeStruct((N, 1, label_size), jnp.float32),
        in_specs=[_VMEM] * n_in,
        out_specs=_VMEM,
        scratch_shapes=[pltpu.VMEM((N, L0 + 2, c_max), jnp.float32)],
        # N=2 is latency-bound: no grid (extra grid steps are pure overhead).
        # TODO(synk): for large N on v7x, add a batch grid axis with
        # dimension_semantics=("parallel",) so both TensorCores are used.
    )(x, *conv_args, wf_t, bf_t)
    return out3d.reshape(N, label_size)


# ----------------------------------------------------------------------------
# Pure-JAX reference (forward semantics of the PyTorch module) for validation
# ----------------------------------------------------------------------------
def _reference_forward(x_ncl, conv_ws, gammas, betas, fc_ws, fc_bs):
    x = jnp.transpose(x_ncl, (0, 2, 1)).astype(jnp.float32)
    for w, g, b in zip(conv_ws, gammas, betas):
        N, L, Cin = x.shape
        xp = jnp.pad(x, ((0, 0), (1, 1), (0, 0)))
        y = sum(jnp.einsum("nlc,cd->nld", xp[:, k:k + L, :], w[k]) for k in range(3))
        mean = jnp.mean(y, axis=(0, 1), keepdims=True)
        var = jnp.mean((y - mean) ** 2, axis=(0, 1), keepdims=True)
        y = (y - mean) * lax.rsqrt(var + BN_EPS)
        y = y * g.reshape(1, 1, -1) + b.reshape(1, 1, -1)
        y = jnp.maximum(y, 0.0)
        L_out = (L - 1) // 2 + 1
        yp = jnp.pad(y, ((0, 0), (1, 1), (0, 0)), constant_values=-jnp.inf)
        x = jnp.stack([jnp.max(yp[:, 2 * j:2 * j + 3, :], axis=1)
                       for j in range(L_out)], axis=1)
    h = jnp.mean(x, axis=1)
    for w, b in zip(fc_ws, fc_bs):
        h = h @ w + b
    return h


if __name__ == "__main__":
    key = jax.random.PRNGKey(0)
    keys = jax.random.split(key, 16)

    # Module config: callPredictor(input_channel=1, conv_channel=[8, 8, 6],
    #                              fc_size=[64, 16], label_size=1)
    N, Cin, L = 2, 1, 16
    conv_channels = [8, 8, 6]
    fc_sizes = [64, 16]
    label_size = 1

    # Input in PyTorch NCL layout.
    x_ncl = jax.random.normal(keys[0], (N, Cin, L), jnp.float32)

    # Conv weights: torch shape (Cout, Cin, 3); stored here as (3, Cin, Cout).
    conv_ws, gammas, betas = [], [], []
    in_c = Cin
    for i, out_c in enumerate(conv_channels):
        bound = 1.0 / (in_c * 3) ** 0.5
        conv_ws.append(jax.random.uniform(
            keys[1 + i], (3, in_c, out_c), jnp.float32, -bound, bound))
        gammas.append(jnp.ones((1, out_c), jnp.float32))     # BN weight default
        betas.append(jnp.zeros((1, out_c), jnp.float32))     # BN bias default
        in_c = out_c

    # Linear layers (incl. output_func): torch weight (out, in); stored (in, out).
    fc_dims = [in_c] + fc_sizes + [label_size]
    fc_ws, fc_bs = [], []
    for i in range(len(fc_dims) - 1):
        d_in, d_out = fc_dims[i], fc_dims[i + 1]
        bound = 1.0 / d_in ** 0.5
        fc_ws.append(jax.random.uniform(
            keys[8 + 2 * i], (d_in, d_out), jnp.float32, -bound, bound))
        fc_bs.append(jax.random.uniform(
            keys[9 + 2 * i], (1, d_out), jnp.float32, -bound, bound))

    out = call_predictor_forward(x_ncl, conv_ws, gammas, betas, fc_ws, fc_bs)
    out = jax.block_until_ready(out)
    assert out.shape == (N, label_size), out.shape
    assert bool(jnp.all(jnp.isfinite(out)))

    ref = _reference_forward(x_ncl, conv_ws, gammas, betas, fc_ws, fc_bs)
    assert bool(jnp.allclose(out, ref, rtol=1e-3, atol=1e-3)), (out, ref)
    print("KERNEL_OK")
</pallas_src>

<mosaic_0001>
module attributes {stable_mosaic.version = 11 : i64} {
  func.func @kernel(%arg0: memref<2x16x1xf32, #tpu.memory_space<vmem>>, %arg1: memref<3x8xf32, #tpu.memory_space<vmem>>, %arg2: memref<1x1x8xf32, #tpu.memory_space<vmem>>, %arg3: memref<1x1x8xf32, #tpu.memory_space<vmem>>, %arg4: memref<24x8xf32, #tpu.memory_space<vmem>>, %arg5: memref<1x1x8xf32, #tpu.memory_space<vmem>>, %arg6: memref<1x1x8xf32, #tpu.memory_space<vmem>>, %arg7: memref<24x6xf32, #tpu.memory_space<vmem>>, %arg8: memref<1x1x6xf32, #tpu.memory_space<vmem>>, %arg9: memref<1x1x6xf32, #tpu.memory_space<vmem>>, %arg10: memref<1x6xf32, #tpu.memory_space<vmem>>, %arg11: memref<1x1xf32, #tpu.memory_space<vmem>>, %arg12: memref<2x1x1xf32, #tpu.memory_space<vmem>>, %arg13: memref<2x18x8xf32, #tpu.memory_space<vmem>>) attributes {dimension_semantics = [], scalar_prefetch = 0 : i64, scratch_operands = 1 : i64, tpu.core_type = #tpu.core_type<tc>} {
    %cst = arith.constant 0.000000e+00 : f32
    %0 = vector.broadcast %cst : f32 to vector<2x1x8xf32>
    %c0 = arith.constant 0 : index
    %c0_0 = arith.constant 0 : index
    %c0_1 = arith.constant 0 : index
    %1 = vector.load %arg13[%c0, %c0_0, %c0_1] : memref<2x18x8xf32, #tpu.memory_space<vmem>>, vector<2x1x8xf32>
    tpu.vector_store %arg13[%c0, %c0_0, %c0_1], %0 {strides = array<i32>} : memref<2x18x8xf32, #tpu.memory_space<vmem>>, vector<2x1x8xf32>,
    %c0_2 = arith.constant 0 : index
    %c0_3 = arith.constant 0 : index
    %c0_4 = arith.constant 0 : index
    %2 = vector.load %arg0[%c0_2, %c0_3, %c0_4] : memref<2x16x1xf32, #tpu.memory_space<vmem>>, vector<2x16x1xf32>
    %cst_5 = arith.constant 0.000000e+00 : f32
    %3 = vector.broadcast %cst_5 : f32 to vector<2x1x8xf32>
    %c0_6 = arith.constant 0 : index
    %c17 = arith.constant 17 : index
    %c0_7 = arith.constant 0 : index
    %4 = vector.load %arg13[%c0_6, %c17, %c0_7] : memref<2x18x8xf32, #tpu.memory_space<vmem>>, vector<2x1x8xf32>
    tpu.vector_store %arg13[%c0_6, %c17, %c0_7], %3 {strides = array<i32>} : memref<2x18x8xf32, #tpu.memory_space<vmem>>, vector<2x1x8xf32>,
    %c0_8 = arith.constant 0 : index
    %c1 = arith.constant 1 : index
    %c0_9 = arith.constant 0 : index
    %5 = vector.load %arg13[%c0_8, %c1, %c0_9] : memref<2x18x8xf32, #tpu.memory_space<vmem>>, vector<2x16x1xf32>
    tpu.vector_store %arg13[%c0_8, %c1, %c0_9], %2 {strides = array<i32>} : memref<2x18x8xf32, #tpu.memory_space<vmem>>, vector<2x16x1xf32>,
    %cst_10 = arith.constant 0.000000e+00 : f32
    %6 = vector.broadcast %cst_10 : f32 to vector<2x16x8xf32>
    %c0_11 = arith.constant 0 : index
    %c0_12 = arith.constant 0 : index
    %c0_13 = arith.constant 0 : index
    %7 = vector.load %arg13[%c0_11, %c0_12, %c0_13] : memref<2x18x8xf32, #tpu.memory_space<vmem>>, vector<2x16x1xf32>
    %c0_14 = arith.constant 0 : index
    %c0_15 = arith.constant 0 : index
    %8 = vector.load %arg1[%c0_14, %c0_15] : memref<3x8xf32, #tpu.memory_space<vmem>>, vector<1x8xf32>
    %9 = vector.shape_cast %8 : vector<1x8xf32> to vector<1x1x8xf32>
    %10 = vector.broadcast %7 : vector<2x16x1xf32> to vector<2x16x8xf32>
    %11 = vector.broadcast %9 : vector<1x1x8xf32> to vector<2x16x8xf32>
    %12 = arith.mulf %10, %11 : vector<2x16x8xf32>
    %13 = arith.addf %6, %12 : vector<2x16x8xf32>
    %c0_16 = arith.constant 0 : index
    %c1_17 = arith.constant 1 : index
    %c0_18 = arith.constant 0 : index
    %14 = vector.load %arg13[%c0_16, %c1_17, %c0_18] : memref<2x18x8xf32, #tpu.memory_space<vmem>>, vector<2x16x1xf32>
    %c1_19 = arith.constant 1 : index
    %c0_20 = arith.constant 0 : index
    %15 = vector.load %arg1[%c1_19, %c0_20] : memref<3x8xf32, #tpu.memory_space<vmem>>, vector<1x8xf32>
    %16 = vector.shape_cast %15 : vector<1x8xf32> to vector<1x1x8xf32>
    %17 = vector.broadcast %14 : vector<2x16x1xf32> to vector<2x16x8xf32>
    %18 = vector.broadcast %16 : vector<1x1x8xf32> to vector<2x16x8xf32>
    %19 = arith.mulf %17, %18 : vector<2x16x8xf32>
    %20 = arith.addf %13, %19 : vector<2x16x8xf32>
    %c0_21 = arith.constant 0 : index
    %c2 = arith.constant 2 : index
    %c0_22 = arith.constant 0 : index
    %21 = vector.load %arg13[%c0_21, %c2, %c0_22] : memref<2x18x8xf32, #tpu.memory_space<vmem>>, vector<2x16x1xf32>
    %c2_23 = arith.constant 2 : index
    %c0_24 = arith.constant 0 : index
    %22 = vector.load %arg1[%c2_23, %c0_24] : memref<3x8xf32, #tpu.memory_space<vmem>>, vector<1x8xf32>
    %23 = vector.shape_cast %22 : vector<1x8xf32> to vector<1x1x8xf32>
    %24 = vector.broadcast %21 : vector<2x16x1xf32> to vector<2x16x8xf32>
    %25 = vector.broadcast %23 : vector<1x1x8xf32> to vector<2x16x8xf32>
    %26 = arith.mulf %24, %25 : vector<2x16x8xf32>
    %27 = arith.addf %20, %26 : vector<2x16x8xf32>
    %cst_25 = arith.constant dense<0.000000e+00> : vector<2x8xf32>
    %28 = vector.multi_reduction <add>, %27, %cst_25 [1] : vector<2x16x8xf32> to vector<2x8xf32>
    %29 = vector.shape_cast %28 : vector<2x8xf32> to vector<2x1x8xf32>
    %30 = arith.mulf %27, %27 : vector<2x16x8xf32>
    %cst_26 = arith.constant dense<0.000000e+00> : vector<2x8xf32>
    %31 = vector.multi_reduction <add>, %30, %cst_26 [1] : vector<2x16x8xf32> to vector<2x8xf32>
    %32 = vector.shape_cast %31 : vector<2x8xf32> to vector<2x1x8xf32>
    %33 = vector.extract_strided_slice %29 {offsets = [0, 0, 0], sizes = [1, 1, 8], strides = [1, 1, 1]} : vector<2x1x8xf32> to vector<1x1x8xf32>
    %34 = vector.extract_strided_slice %32 {offsets = [0, 0, 0], sizes = [1, 1, 8], strides = [1, 1, 1]} : vector<2x1x8xf32> to vector<1x1x8xf32>
    %35 = vector.extract_strided_slice %29 {offsets = [1, 0, 0], sizes = [1, 1, 8], strides = [1, 1, 1]} : vector<2x1x8xf32> to vector<1x1x8xf32>
    %36 = arith.addf %33, %35 : vector<1x1x8xf32>
    %37 = vector.extract_strided_slice %32 {offsets = [1, 0, 0], sizes = [1, 1, 8], strides = [1, 1, 1]} : vector<2x1x8xf32> to vector<1x1x8xf32>
    %38 = arith.addf %34, %37 : vector<1x1x8xf32>
    %cst_27 = arith.constant 3.125000e-02 : f32
    %39 = vector.broadcast %cst_27 : f32 to vector<1x1x8xf32>
    %40 = arith.mulf %36, %39 : vector<1x1x8xf32>
    %cst_28 = arith.constant 3.125000e-02 : f32
    %41 = vector.broadcast %cst_28 : f32 to vector<1x1x8xf32>
    %42 = arith.mulf %38, %41 : vector<1x1x8xf32>
    %43 = arith.mulf %40, %40 : vector<1x1x8xf32>
    %44 = arith.subf %42, %43 : vector<1x1x8xf32>
    %c0_29 = arith.constant 0 : index
    %c0_30 = arith.constant 0 : index
    %c0_31 = arith.constant 0 : index
    %45 = vector.load %arg2[%c0_29, %c0_30, %c0_31] : memref<1x1x8xf32, #tpu.memory_space<vmem>>, vector<1x1x8xf32>
    %cst_32 = arith.constant 9.99999974E-6 : f32
    %46 = vector.broadcast %cst_32 : f32 to vector<1x1x8xf32>
    %47 = arith.addf %44, %46 : vector<1x1x8xf32>
    %48 = math.rsqrt %47 : vector<1x1x8xf32>
    %49 = arith.mulf %45, %48 : vector<1x1x8xf32>
    %c0_33 = arith.constant 0 : index
    %c0_34 = arith.constant 0 : index
    %c0_35 = arith.constant 0 : index
    %50 = vector.load %arg3[%c0_33, %c0_34, %c0_35] : memref<1x1x8xf32, #tpu.memory_space<vmem>>, vector<1x1x8xf32>
    %51 = arith.mulf %40, %49 : vector<1x1x8xf32>
    %52 = arith.subf %50, %51 : vector<1x1x8xf32>
    %53 = vector.broadcast %49 : vector<1x1x8xf32> to vector<2x16x8xf32>
    %54 = arith.mulf %27, %53 : vector<2x16x8xf32>
    %55 = vector.broadcast %52 : vector<1x1x8xf32> to vector<2x16x8xf32>
    %56 = arith.addf %54, %55 : vector<2x16x8xf32>
    %cst_36 = arith.constant 0.000000e+00 : f32
    %57 = vector.broadcast %cst_36 : f32 to vector<2x16x8xf32>
    %58 = arith.maximumf %56, %57 : vector<2x16x8xf32>
    %c0_37 = arith.constant 0 : index
    %c1_38 = arith.constant 1 : index
    %c0_39 = arith.constant 0 : index
    %59 = vector.load %arg13[%c0_37, %c1_38, %c0_39] : memref<2x18x8xf32, #tpu.memory_space<vmem>>, vector<2x16x8xf32>
    tpu.vector_store %arg13[%c0_37, %c1_38, %c0_39], %58 {strides = array<i32>} : memref<2x18x8xf32, #tpu.memory_space<vmem>>, vector<2x16x8xf32>,
    %c0_40 = arith.constant 0 : index
    %c0_41 = arith.constant 0 : index
    %c0_42 = arith.constant 0 : index
    %60 = tpu.strided_load %arg13[%c0_40, %c0_41, %c0_42] {strides = array<i32: 1, 2, 1>} : memref<2x18x8xf32, #tpu.memory_space<vmem>>, vector<2x8x8xf32>
    %c0_43 = arith.constant 0 : index
    %c1_44 = arith.constant 1 : index
    %c0_45 = arith.constant 0 : index
    %61 = tpu.strided_load %arg13[%c0_43, %c1_44, %c0_45] {strides = array<i32: 1, 2, 1>} : memref<2x18x8xf32, #tpu.memory_space<vmem>>, vector<2x8x8xf32>
    %c0_46 = arith.constant 0 : index
    %c2_47 = arith.constant 2 : index
    %c0_48 = arith.constant 0 : index
    %62 = tpu.strided_load %arg13[%c0_46, %c2_47, %c0_48] {strides = array<i32: 1, 2, 1>} : memref<2x18x8xf32, #tpu.memory_space<vmem>>, vector<2x8x8xf32>
    %63 = arith.maximumf %60, %61 : vector<2x8x8xf32>
    %64 = arith.maximumf %63, %62 : vector<2x8x8xf32>
    %cst_49 = arith.constant 0.000000e+00 : f32
    %65 = vector.broadcast %cst_49 : f32 to vector<2x1x8xf32>
    %c0_50 = arith.constant 0 : index
    %c9 = arith.constant 9 : index
    %c0_51 = arith.constant 0 : index
    %66 = vector.load %arg13[%c0_50, %c9, %c0_51] : memref<2x18x8xf32, #tpu.memory_space<vmem>>, vector<2x1x8xf32>
    tpu.vector_store %arg13[%c0_50, %c9, %c0_51], %65 {strides = array<i32>} : memref<2x18x8xf32, #tpu.memory_space<vmem>>, vector<2x1x8xf32>,
    %c0_52 = arith.constant 0 : index
    %c1_53 = arith.constant 1 : index
    %c0_54 = arith.constant 0 : index
    %67 = vector.load %arg13[%c0_52, %c1_53, %c0_54] : memref<2x18x8xf32, #tpu.memory_space<vmem>>, vector<2x8x8xf32>
    tpu.vector_store %arg13[%c0_52, %c1_53, %c0_54], %64 {strides = array<i32>} : memref<2x18x8xf32, #tpu.memory_space<vmem>>, vector<2x8x8xf32>,
    %cst_55 = arith.constant 0.000000e+00 : f32
    %68 = vector.broadcast %cst_55 : f32 to vector<2x8x8xf32>
    %c0_56 = arith.constant 0 : index
    %c0_57 = arith.constant 0 : index
    %c0_58 = arith.constant 0 : index
    %69 = vector.load %arg13[%c0_56, %c0_57, %c0_58] : memref<2x18x8xf32, #tpu.memory_space<vmem>>, vector<2x8x8xf32>
    %c0_59 = arith.constant 0 : index
    %c0_60 = arith.constant 0 : index
    %70 = vector.load %arg4[%c0_59, %c0_60] : memref<24x8xf32, #tpu.memory_space<vmem>>, vector<1x8xf32>
    %71 = vector.extract_strided_slice %69 {offsets = [0, 0, 0], sizes = [2, 8, 1], strides = [1, 1, 1]} : vector<2x8x8xf32> to vector<2x8x1xf32>
    %72 = vector.shape_cast %70 : vector<1x8xf32> to vector<1x1x8xf32>
    %73 = vector.broadcast %71 : vector<2x8x1xf32> to vector<2x8x8xf32>
    %74 = vector.broadcast %72 : vector<1x1x8xf32> to vector<2x8x8xf32>
    %75 = arith.mulf %73, %74 : vector<2x8x8xf32>
    %76 = arith.addf %68, %75 : vector<2x8x8xf32>
    %c1_61 = arith.constant 1 : index
    %c0_62 = arith.constant 0 : index
    %77 = vector.load %arg4[%c1_61, %c0_62] : memref<24x8xf32, #tpu.memory_space<vmem>>, vector<1x8xf32>
    %78 = vector.extract_strided_slice %69 {offsets = [0, 0, 1], sizes = [2, 8, 1], strides = [1, 1, 1]} : vector<2x8x8xf32> to vector<2x8x1xf32>
    %79 = vector.shape_cast %77 : vector<1x8xf32> to vector<1x1x8xf32>
    %80 = vector.broadcast %78 : vector<2x8x1xf32> to vector<2x8x8xf32>
    %81 = vector.broadcast %79 : vector<1x1x8xf32> to vector<2x8x8xf32>
    %82 = arith.mulf %80, %81 : vector<2x8x8xf32>
    %83 = arith.addf %76, %82 : vector<2x8x8xf32>
    %c2_63 = arith.constant 2 : index
    %c0_64 = arith.constant 0 : index
    %84 = vector.load %arg4[%c2_63, %c0_64] : memref<24x8xf32, #tpu.memory_space<vmem>>, vector<1x8xf32>
    %85 = vector.extract_strided_slice %69 {offsets = [0, 0, 2], sizes = [2, 8, 1], strides = [1, 1, 1]} : vector<2x8x8xf32> to vector<2x8x1xf32>
    %86 = vector.shape_cast %84 : vector<1x8xf32> to vector<1x1x8xf32>
    %87 = vector.broadcast %85 : vector<2x8x1xf32> to vector<2x8x8xf32>
    %88 = vector.broadcast %86 : vector<1x1x8xf32> to vector<2x8x8xf32>
    %89 = arith.mulf %87, %88 : vector<2x8x8xf32>
    %90 = arith.addf %83, %89 : vector<2x8x8xf32>
    %c3 = arith.constant 3 : index
    %c0_65 = arith.constant 0 : index
    %91 = vector.load %arg4[%c3, %c0_65] : memref<24x8xf32, #tpu.memory_space<vmem>>, vector<1x8xf32>
    %92 = vector.extract_strided_slice %69 {offsets = [0, 0, 3], sizes = [2, 8, 1], strides = [1, 1, 1]} : vector<2x8x8xf32> to vector<2x8x1xf32>
    %93 = vector.shape_cast %91 : vector<1x8xf32> to vector<1x1x8xf32>
    %94 = vector.broadcast %92 : vector<2x8x1xf32> to vector<2x8x8xf32>
    %95 = vector.broadcast %93 : vector<1x1x8xf32> to vector<2x8x8xf32>
    %96 = arith.mulf %94, %95 : vector<2x8x8xf32>
    %97 = arith.addf %90, %96 : vector<2x8x8xf32>
    %c4 = arith.constant 4 : index
    %c0_66 = arith.constant 0 : index
    %98 = vector.load %arg4[%c4, %c0_66] : memref<24x8xf32, #tpu.memory_space<vmem>>, vector<1x8xf32>
    %99 = vector.extract_strided_slice %69 {offsets = [0, 0, 4], sizes = [2, 8, 1], strides = [1, 1, 1]} : vector<2x8x8xf32> to vector<2x8x1xf32>
    %100 = vector.shape_cast %98 : vector<1x8xf32> to vector<1x1x8xf32>
    %101 = vector.broadcast %99 : vector<2x8x1xf32> to vector<2x8x8xf32>
    %102 = vector.broadcast %100 : vector<1x1x8xf32> to vector<2x8x8xf32>
    %103 = arith.mulf %101, %102 : vector<2x8x8xf32>
    %104 = arith.addf %97, %103 : vector<2x8x8xf32>
    %c5 = arith.constant 5 : index
    %c0_67 = arith.constant 0 : index
    %105 = vector.load %arg4[%c5, %c0_67] : memref<24x8xf32, #tpu.memory_space<vmem>>, vector<1x8xf32>
    %106 = vector.extract_strided_slice %69 {offsets = [0, 0, 5], sizes = [2, 8, 1], strides = [1, 1, 1]} : vector<2x8x8xf32> to vector<2x8x1xf32>
    %107 = vector.shape_cast %105 : vector<1x8xf32> to vector<1x1x8xf32>
    %108 = vector.broadcast %106 : vector<2x8x1xf32> to vector<2x8x8xf32>
    %109 = vector.broadcast %107 : vector<1x1x8xf32> to vector<2x8x8xf32>
    %110 = arith.mulf %108, %109 : vector<2x8x8xf32>
    %111 = arith.addf %104, %110 : vector<2x8x8xf32>
    %c6 = arith.constant 6 : index
    %c0_68 = arith.constant 0 : index
    %112 = vector.load %arg4[%c6, %c0_68] : memref<24x8xf32, #tpu.memory_space<vmem>>, vector<1x8xf32>
    %113 = vector.extract_strided_slice %69 {offsets = [0, 0, 6], sizes = [2, 8, 1], strides = [1, 1, 1]} : vector<2x8x8xf32> to vector<2x8x1xf32>
    %114 = vector.shape_cast %112 : vector<1x8xf32> to vector<1x1x8xf32>
    %115 = vector.broadcast %113 : vector<2x8x1xf32> to vector<2x8x8xf32>
    %116 = vector.broadcast %114 : vector<1x1x8xf32> to vector<2x8x8xf32>
    %117 = arith.mulf %115, %116 : vector<2x8x8xf32>
    %118 = arith.addf %111, %117 : vector<2x8x8xf32>
    %c7 = arith.constant 7 : index
    %c0_69 = arith.constant 0 : index
    %119 = vector.load %arg4[%c7, %c0_69] : memref<24x8xf32, #tpu.memory_space<vmem>>, vector<1x8xf32>
    %120 = vector.extract_strided_slice %69 {offsets = [0, 0, 7], sizes = [2, 8, 1], strides = [1, 1, 1]} : vector<2x8x8xf32> to vector<2x8x1xf32>
    %121 = vector.shape_cast %119 : vector<1x8xf32> to vector<1x1x8xf32>
    %122 = vector.broadcast %120 : vector<2x8x1xf32> to vector<2x8x8xf32>
    %123 = vector.broadcast %121 : vector<1x1x8xf32> to vector<2x8x8xf32>
    %124 = arith.mulf %122, %123 : vector<2x8x8xf32>
    %125 = arith.addf %118, %124 : vector<2x8x8xf32>
    %c0_70 = arith.constant 0 : index
    %c1_71 = arith.constant 1 : index
    %c0_72 = arith.constant 0 : index
    %126 = vector.load %arg13[%c0_70, %c1_71, %c0_72] : memref<2x18x8xf32, #tpu.memory_space<vmem>>, vector<2x8x8xf32>
    %c8 = arith.constant 8 : index
    %c0_73 = arith.constant 0 : index
    %127 = vector.load %arg4[%c8, %c0_73] : memref<24x8xf32, #tpu.memory_space<vmem>>, vector<1x8xf32>
    %128 = vector.extract_strided_slice %126 {offsets = [0, 0, 0], sizes = [2, 8, 1], strides = [1, 1, 1]} : vector<2x8x8xf32> to vector<2x8x1xf32>
    %129 = vector.shape_cast %127 : vector<1x8xf32> to vector<1x1x8xf32>
    %130 = vector.broadcast %128 : vector<2x8x1xf32> to vector<2x8x8xf32>
    %131 = vector.broadcast %129 : vector<1x1x8xf32> to vector<2x8x8xf32>
    %132 = arith.mulf %130, %131 : vector<2x8x8xf32>
    %133 = arith.addf %125, %132 : vector<2x8x8xf32>
    %c9_74 = arith.constant 9 : index
    %c0_75 = arith.constant 0 : index
    %134 = vector.load %arg4[%c9_74, %c0_75] : memref<24x8xf32, #tpu.memory_space<vmem>>, vector<1x8xf32>
    %135 = vector.extract_strided_slice %126 {offsets = [0, 0, 1], sizes = [2, 8, 1], strides = [1, 1, 1]} : vector<2x8x8xf32> to vector<2x8x1xf32>
    %136 = vector.shape_cast %134 : vector<1x8xf32> to vector<1x1x8xf32>
    %137 = vector.broadcast %135 : vector<2x8x1xf32> to vector<2x8x8xf32>
    %138 = vector.broadcast %136 : vector<1x1x8xf32> to vector<2x8x8xf32>
    %139 = arith.mulf %137, %138 : vector<2x8x8xf32>
    %140 = arith.addf %133, %139 : vector<2x8x8xf32>
    %c10 = arith.constant 10 : index
    %c0_76 = arith.constant 0 : index
    %141 = vector.load %arg4[%c10, %c0_76] : memref<24x8xf32, #tpu.memory_space<vmem>>, vector<1x8xf32>
    %142 = vector.extract_strided_slice %126 {offsets = [0, 0, 2], sizes = [2, 8, 1], strides = [1, 1, 1]} : vector<2x8x8xf32> to vector<2x8x1xf32>
    %143 = vector.shape_cast %141 : vector<1x8xf32> to vector<1x1x8xf32>
    %144 = vector.broadcast %142 : vector<2x8x1xf32> to vector<2x8x8xf32>
    %145 = vector.broadcast %143 : vector<1x1x8xf32> to vector<2x8x8xf32>
    %146 = arith.mulf %144, %145 : vector<2x8x8xf32>
    %147 = arith.addf %140, %146 : vector<2x8x8xf32>
    %c11 = arith.constant 11 : index
    %c0_77 = arith.constant 0 : index
    %148 = vector.load %arg4[%c11, %c0_77] : memref<24x8xf32, #tpu.memory_space<vmem>>, vector<1x8xf32>
    %149 = vector.extract_strided_slice %126 {offsets = [0, 0, 3], sizes = [2, 8, 1], strides = [1, 1, 1]} : vector<2x8x8xf32> to vector<2x8x1xf32>
    %150 = vector.shape_cast %148 : vector<1x8xf32> to vector<1x1x8xf32>
    %151 = vector.broadcast %149 : vector<2x8x1xf32> to vector<2x8x8xf32>
    %152 = vector.broadcast %150 : vector<1x1x8xf32> to vector<2x8x8xf32>
    %153 = arith.mulf %151, %152 : vector<2x8x8xf32>
    %154 = arith.addf %147, %153 : vector<2x8x8xf32>
    %c12 = arith.constant 12 : index
    %c0_78 = arith.constant 0 : index
    %155 = vector.load %arg4[%c12, %c0_78] : memref<24x8xf32, #tpu.memory_space<vmem>>, vector<1x8xf32>
    %156 = vector.extract_strided_slice %126 {offsets = [0, 0, 4], sizes = [2, 8, 1], strides = [1, 1, 1]} : vector<2x8x8xf32> to vector<2x8x1xf32>
    %157 = vector.shape_cast %155 : vector<1x8xf32> to vector<1x1x8xf32>
    %158 = vector.broadcast %156 : vector<2x8x1xf32> to vector<2x8x8xf32>
    %159 = vector.broadcast %157 : vector<1x1x8xf32> to vector<2x8x8xf32>
    %160 = arith.mulf %158, %159 : vector<2x8x8xf32>
    %161 = arith.addf %154, %160 : vector<2x8x8xf32>
    %c13 = arith.constant 13 : index
    %c0_79 = arith.constant 0 : index
    %162 = vector.load %arg4[%c13, %c0_79] : memref<24x8xf32, #tpu.memory_space<vmem>>, vector<1x8xf32>
    %163 = vector.extract_strided_slice %126 {offsets = [0, 0, 5], sizes = [2, 8, 1], strides = [1, 1, 1]} : vector<2x8x8xf32> to vector<2x8x1xf32>
    %164 = vector.shape_cast %162 : vector<1x8xf32> to vector<1x1x8xf32>
    %165 = vector.broadcast %163 : vector<2x8x1xf32> to vector<2x8x8xf32>
    %166 = vector.broadcast %164 : vector<1x1x8xf32> to vector<2x8x8xf32>
    %167 = arith.mulf %165, %166 : vector<2x8x8xf32>
    %168 = arith.addf %161, %167 : vector<2x8x8xf32>
    %c14 = arith.constant 14 : index
    %c0_80 = arith.constant 0 : index
    %169 = vector.load %arg4[%c14, %c0_80] : memref<24x8xf32, #tpu.memory_space<vmem>>, vector<1x8xf32>
    %170 = vector.extract_strided_slice %126 {offsets = [0, 0, 6], sizes = [2, 8, 1], strides = [1, 1, 1]} : vector<2x8x8xf32> to vector<2x8x1xf32>
    %171 = vector.shape_cast %169 : vector<1x8xf32> to vector<1x1x8xf32>
    %172 = vector.broadcast %170 : vector<2x8x1xf32> to vector<2x8x8xf32>
    %173 = vector.broadcast %171 : vector<1x1x8xf32> to vector<2x8x8xf32>
    %174 = arith.mulf %172, %173 : vector<2x8x8xf32>
    %175 = arith.addf %168, %174 : vector<2x8x8xf32>
    %c15 = arith.constant 15 : index
    %c0_81 = arith.constant 0 : index
    %176 = vector.load %arg4[%c15, %c0_81] : memref<24x8xf32, #tpu.memory_space<vmem>>, vector<1x8xf32>
    %177 = vector.extract_strided_slice %126 {offsets = [0, 0, 7], sizes = [2, 8, 1], strides = [1, 1, 1]} : vector<2x8x8xf32> to vector<2x8x1xf32>
    %178 = vector.shape_cast %176 : vector<1x8xf32> to vector<1x1x8xf32>
    %179 = vector.broadcast %177 : vector<2x8x1xf32> to vector<2x8x8xf32>
    %180 = vector.broadcast %178 : vector<1x1x8xf32> to vector<2x8x8xf32>
    %181 = arith.mulf %179, %180 : vector<2x8x8xf32>
    %182 = arith.addf %175, %181 : vector<2x8x8xf32>
    %c0_82 = arith.constant 0 : index
    %c2_83 = arith.constant 2 : index
    %c0_84 = arith.constant 0 : index
    %183 = vector.load %arg13[%c0_82, %c2_83, %c0_84] : memref<2x18x8xf32, #tpu.memory_space<vmem>>, vector<2x8x8xf32>
    %c16 = arith.constant 16 : index
    %c0_85 = arith.constant 0 : index
    %184 = vector.load %arg4[%c16, %c0_85] : memref<24x8xf32, #tpu.memory_space<vmem>>, vector<1x8xf32>
    %185 = vector.extract_strided_slice %183 {offsets = [0, 0, 0], sizes = [2, 8, 1], strides = [1, 1, 1]} : vector<2x8x8xf32> to vector<2x8x1xf32>
    %186 = vector.shape_cast %184 : vector<1x8xf32> to vector<1x1x8xf32>
    %187 = vector.broadcast %185 : vector<2x8x1xf32> to vector<2x8x8xf32>
    %188 = vector.broadcast %186 : vector<1x1x8xf32> to vector<2x8x8xf32>
    %189 = arith.mulf %187, %188 : vector<2x8x8xf32>
    %190 = arith.addf %182, %189 : vector<2x8x8xf32>
    %c17_86 = arith.constant 17 : index
    %c0_87 = arith.constant 0 : index
    %191 = vector.load %arg4[%c17_86, %c0_87] : memref<24x8xf32, #tpu.memory_space<vmem>>, vector<1x8xf32>
    %192 = vector.extract_strided_slice %183 {offsets = [0, 0, 1], sizes = [2, 8, 1], strides = [1, 1, 1]} : vector<2x8x8xf32> to vector<2x8x1xf32>
    %193 = vector.shape_cast %191 : vector<1x8xf32> to vector<1x1x8xf32>
    %194 = vector.broadcast %192 : vector<2x8x1xf32> to vector<2x8x8xf32>
    %195 = vector.broadcast %193 : vector<1x1x8xf32> to vector<2x8x8xf32>
    %196 = arith.mulf %194, %195 : vector<2x8x8xf32>
    %197 = arith.addf %190, %196 : vector<2x8x8xf32>
    %c18 = arith.constant 18 : index
    %c0_88 = arith.constant 0 : index
    %198 = vector.load %arg4[%c18, %c0_88] : memref<24x8xf32, #tpu.memory_space<vmem>>, vector<1x8xf32>
    %199 = vector.extract_strided_slice %183 {offsets = [0, 0, 2], sizes = [2, 8, 1], strides = [1, 1, 1]} : vector<2x8x8xf32> to vector<2x8x1xf32>
    %200 = vector.shape_cast %198 : vector<1x8xf32> to vector<1x1x8xf32>
    %201 = vector.broadcast %199 : vector<2x8x1xf32> to vector<2x8x8xf32>
    %202 = vector.broadcast %200 : vector<1x1x8xf32> to vector<2x8x8xf32>
    %203 = arith.mulf %201, %202 : vector<2x8x8xf32>
    %204 = arith.addf %197, %203 : vector<2x8x8xf32>
    %c19 = arith.constant 19 : index
    %c0_89 = arith.constant 0 : index
    %205 = vector.load %arg4[%c19, %c0_89] : memref<24x8xf32, #tpu.memory_space<vmem>>, vector<1x8xf32>
    %206 = vector.extract_strided_slice %183 {offsets = [0, 0, 3], sizes = [2, 8, 1], strides = [1, 1, 1]} : vector<2x8x8xf32> to vector<2x8x1xf32>
    %207 = vector.shape_cast %205 : vector<1x8xf32> to vector<1x1x8xf32>
    %208 = vector.broadcast %206 : vector<2x8x1xf32> to vector<2x8x8xf32>
    %209 = vector.broadcast %207 : vector<1x1x8xf32> to vector<2x8x8xf32>
    %210 = arith.mulf %208, %209 : vector<2x8x8xf32>
    %211 = arith.addf %204, %210 : vector<2x8x8xf32>
    %c20 = arith.constant 20 : index
    %c0_90 = arith.constant 0 : index
    %212 = vector.load %arg4[%c20, %c0_90] : memref<24x8xf32, #tpu.memory_space<vmem>>, vector<1x8xf32>
    %213 = vector.extract_strided_slice %183 {offsets = [0, 0, 4], sizes = [2, 8, 1], strides = [1, 1, 1]} : vector<2x8x8xf32> to vector<2x8x1xf32>
    %214 = vector.shape_cast %212 : vector<1x8xf32> to vector<1x1x8xf32>
    %215 = vector.broadcast %213 : vector<2x8x1xf32> to vector<2x8x8xf32>
    %216 = vector.broadcast %214 : vector<1x1x8xf32> to vector<2x8x8xf32>
    %217 = arith.mulf %215, %216 : vector<2x8x8xf32>
    %218 = arith.addf %211, %217 : vector<2x8x8xf32>
    %c21 = arith.constant 21 : index
    %c0_91 = arith.constant 0 : index
    %219 = vector.load %arg4[%c21, %c0_91] : memref<24x8xf32, #tpu.memory_space<vmem>>, vector<1x8xf32>
    %220 = vector.extract_strided_slice %183 {offsets = [0, 0, 5], sizes = [2, 8, 1], strides = [1, 1, 1]} : vector<2x8x8xf32> to vector<2x8x1xf32>
    %221 = vector.shape_cast %219 : vector<1x8xf32> to vector<1x1x8xf32>
    %222 = vector.broadcast %220 : vector<2x8x1xf32> to vector<2x8x8xf32>
    %223 = vector.broadcast %221 : vector<1x1x8xf32> to vector<2x8x8xf32>
    %224 = arith.mulf %222, %223 : vector<2x8x8xf32>
    %225 = arith.addf %218, %224 : vector<2x8x8xf32>
    %c22 = arith.constant 22 : index
    %c0_92 = arith.constant 0 : index
    %226 = vector.load %arg4[%c22, %c0_92] : memref<24x8xf32, #tpu.memory_space<vmem>>, vector<1x8xf32>
    %227 = vector.extract_strided_slice %183 {offsets = [0, 0, 6], sizes = [2, 8, 1], strides = [1, 1, 1]} : vector<2x8x8xf32> to vector<2x8x1xf32>
    %228 = vector.shape_cast %226 : vector<1x8xf32> to vector<1x1x8xf32>
    %229 = vector.broadcast %227 : vector<2x8x1xf32> to vector<2x8x8xf32>
    %230 = vector.broadcast %228 : vector<1x1x8xf32> to vector<2x8x8xf32>
    %231 = arith.mulf %229, %230 : vector<2x8x8xf32>
    %232 = arith.addf %225, %231 : vector<2x8x8xf32>
    %c23 = arith.constant 23 : index
    %c0_93 = arith.constant 0 : index
    %233 = vector.load %arg4[%c23, %c0_93] : memref<24x8xf32, #tpu.memory_space<vmem>>, vector<1x8xf32>
    %234 = vector.extract_strided_slice %183 {offsets = [0, 0, 7], sizes = [2, 8, 1], strides = [1, 1, 1]} : vector<2x8x8xf32> to vector<2x8x1xf32>
    %235 = vector.shape_cast %233 : vector<1x8xf32> to vector<1x1x8xf32>
    %236 = vector.broadcast %234 : vector<2x8x1xf32> to vector<2x8x8xf32>
    %237 = vector.broadcast %235 : vector<1x1x8xf32> to vector<2x8x8xf32>
    %238 = arith.mulf %236, %237 : vector<2x8x8xf32>
    %239 = arith.addf %232, %238 : vector<2x8x8xf32>
    %cst_94 = arith.constant dense<0.000000e+00> : vector<2x8xf32>
    %240 = vector.multi_reduction <add>, %239, %cst_94 [1] : vector<2x8x8xf32> to vector<2x8xf32>
    %241 = vector.shape_cast %240 : vector<2x8xf32> to vector<2x1x8xf32>
    %242 = arith.mulf %239, %239 : vector<2x8x8xf32>
    %cst_95 = arith.constant dense<0.000000e+00> : vector<2x8xf32>
    %243 = vector.multi_reduction <add>, %242, %cst_95 [1] : vector<2x8x8xf32> to vector<2x8xf32>
    %244 = vector.shape_cast %243 : vector<2x8xf32> to vector<2x1x8xf32>
    %245 = vector.extract_strided_slice %241 {offsets = [0, 0, 0], sizes = [1, 1, 8], strides = [1, 1, 1]} : vector<2x1x8xf32> to vector<1x1x8xf32>
    %246 = vector.extract_strided_slice %244 {offsets = [0, 0, 0], sizes = [1, 1, 8], strides = [1, 1, 1]} : vector<2x1x8xf32> to vector<1x1x8xf32>
    %247 = vector.extract_strided_slice %241 {offsets = [1, 0, 0], sizes = [1, 1, 8], strides = [1, 1, 1]} : vector<2x1x8xf32> to vector<1x1x8xf32>
    %248 = arith.addf %245, %247 : vector<1x1x8xf32>
    %249 = vector.extract_strided_slice %244 {offsets = [1, 0, 0], sizes = [1, 1, 8], strides = [1, 1, 1]} : vector<2x1x8xf32> to vector<1x1x8xf32>
    %250 = arith.addf %246, %249 : vector<1x1x8xf32>
    %cst_96 = arith.constant 6.250000e-02 : f32
    %251 = vector.broadcast %cst_96 : f32 to vector<1x1x8xf32>
    %252 = arith.mulf %248, %251 : vector<1x1x8xf32>
    %cst_97 = arith.constant 6.250000e-02 : f32
    %253 = vector.broadcast %cst_97 : f32 to vector<1x1x8xf32>
    %254 = arith.mulf %250, %253 : vector<1x1x8xf32>
    %255 = arith.mulf %252, %252 : vector<1x1x8xf32>
    %256 = arith.subf %254, %255 : vector<1x1x8xf32>
    %c0_98 = arith.constant 0 : index
    %c0_99 = arith.constant 0 : index
    %c0_100 = arith.constant 0 : index
    %257 = vector.load %arg5[%c0_98, %c0_99, %c0_100] : memref<1x1x8xf32, #tpu.memory_space<vmem>>, vector<1x1x8xf32>
    %cst_101 = arith.constant 9.99999974E-6 : f32
    %258 = vector.broadcast %cst_101 : f32 to vector<1x1x8xf32>
    %259 = arith.addf %256, %258 : vector<1x1x8xf32>
    %260 = math.rsqrt %259 : vector<1x1x8xf32>
    %261 = arith.mulf %257, %260 : vector<1x1x8xf32>
    %c0_102 = arith.constant 0 : index
    %c0_103 = arith.constant 0 : index
    %c0_104 = arith.constant 0 : index
    %262 = vector.load %arg6[%c0_102, %c0_103, %c0_104] : memref<1x1x8xf32, #tpu.memory_space<vmem>>, vector<1x1x8xf32>
    %263 = arith.mulf %252, %261 : vector<1x1x8xf32>
    %264 = arith.subf %262, %263 : vector<1x1x8xf32>
    %265 = vector.broadcast %261 : vector<1x1x8xf32> to vector<2x8x8xf32>
    %266 = arith.mulf %239, %265 : vector<2x8x8xf32>
    %267 = vector.broadcast %264 : vector<1x1x8xf32> to vector<2x8x8xf32>
    %268 = arith.addf %266, %267 : vector<2x8x8xf32>
    %cst_105 = arith.constant 0.000000e+00 : f32
    %269 = vector.broadcast %cst_105 : f32 to vector<2x8x8xf32>
    %270 = arith.maximumf %268, %269 : vector<2x8x8xf32>
    %c0_106 = arith.constant 0 : index
    %c1_107 = arith.constant 1 : index
    %c0_108 = arith.constant 0 : index
    %271 = vector.load %arg13[%c0_106, %c1_107, %c0_108] : memref<2x18x8xf32, #tpu.memory_space<vmem>>, vector<2x8x8xf32>
    tpu.vector_store %arg13[%c0_106, %c1_107, %c0_108], %270 {strides = array<i32>} : memref<2x18x8xf32, #tpu.memory_space<vmem>>, vector<2x8x8xf32>,
    %c0_109 = arith.constant 0 : index
    %c0_110 = arith.constant 0 : index
    %c0_111 = arith.constant 0 : index
    %272 = tpu.strided_load %arg13[%c0_109, %c0_110, %c0_111] {strides = array<i32: 1, 2, 1>} : memref<2x18x8xf32, #tpu.memory_space<vmem>>, vector<2x4x8xf32>
    %c0_112 = arith.constant 0 : index
    %c1_113 = arith.constant 1 : index
    %c0_114 = arith.constant 0 : index
    %273 = tpu.strided_load %arg13[%c0_112, %c1_113, %c0_114] {strides = array<i32: 1, 2, 1>} : memref<2x18x8xf32, #tpu.memory_space<vmem>>, vector<2x4x8xf32>
    %c0_115 = arith.constant 0 : index
    %c2_116 = arith.constant 2 : index
    %c0_117 = arith.constant 0 : index
    %274 = tpu.strided_load %arg13[%c0_115, %c2_116, %c0_117] {strides = array<i32: 1, 2, 1>} : memref<2x18x8xf32, #tpu.memory_space<vmem>>, vector<2x4x8xf32>
    %275 = arith.maximumf %272, %273 : vector<2x4x8xf32>
    %276 = arith.maximumf %275, %274 : vector<2x4x8xf32>
    %cst_118 = arith.constant 0.000000e+00 : f32
    %277 = vector.broadcast %cst_118 : f32 to vector<2x1x8xf32>
    %c0_119 = arith.constant 0 : index
    %c5_120 = arith.constant 5 : index
    %c0_121 = arith.constant 0 : index
    %278 = vector.load %arg13[%c0_119, %c5_120, %c0_121] : memref<2x18x8xf32, #tpu.memory_space<vmem>>, vector<2x1x8xf32>
    tpu.vector_store %arg13[%c0_119, %c5_120, %c0_121], %277 {strides = array<i32>} : memref<2x18x8xf32, #tpu.memory_space<vmem>>, vector<2x1x8xf32>,
    %c0_122 = arith.constant 0 : index
    %c1_123 = arith.constant 1 : index
    %c0_124 = arith.constant 0 : index
    %279 = vector.load %arg13[%c0_122, %c1_123, %c0_124] : memref<2x18x8xf32, #tpu.memory_space<vmem>>, vector<2x4x8xf32>
    tpu.vector_store %arg13[%c0_122, %c1_123, %c0_124], %276 {strides = array<i32>} : memref<2x18x8xf32, #tpu.memory_space<vmem>>, vector<2x4x8xf32>,
    %cst_125 = arith.constant 0.000000e+00 : f32
    %280 = vector.broadcast %cst_125 : f32 to vector<2x4x6xf32>
    %c0_126 = arith.constant 0 : index
    %c0_127 = arith.constant 0 : index
    %c0_128 = arith.constant 0 : index
    %281 = vector.load %arg13[%c0_126, %c0_127, %c0_128] : memref<2x18x8xf32, #tpu.memory_space<vmem>>, vector<2x4x8xf32>
    %c0_129 = arith.constant 0 : index
    %c0_130 = arith.constant 0 : index
    %282 = vector.load %arg7[%c0_129, %c0_130] : memref<24x6xf32, #tpu.memory_space<vmem>>, vector<1x6xf32>
    %283 = vector.extract_strided_slice %281 {offsets = [0, 0, 0], sizes = [2, 4, 1], strides = [1, 1, 1]} : vector<2x4x8xf32> to vector<2x4x1xf32>
    %284 = vector.shape_cast %282 : vector<1x6xf32> to vector<1x1x6xf32>
    %285 = vector.broadcast %283 : vector<2x4x1xf32> to vector<2x4x6xf32>
    %286 = vector.broadcast %284 : vector<1x1x6xf32> to vector<2x4x6xf32>
    %287 = arith.mulf %285, %286 : vector<2x4x6xf32>
    %288 = arith.addf %280, %287 : vector<2x4x6xf32>
    %c1_131 = arith.constant 1 : index
    %c0_132 = arith.constant 0 : index
    %289 = vector.load %arg7[%c1_131, %c0_132] : memref<24x6xf32, #tpu.memory_space<vmem>>, vector<1x6xf32>
    %290 = vector.extract_strided_slice %281 {offsets = [0, 0, 1], sizes = [2, 4, 1], strides = [1, 1, 1]} : vector<2x4x8xf32> to vector<2x4x1xf32>
    %291 = vector.shape_cast %289 : vector<1x6xf32> to vector<1x1x6xf32>
    %292 = vector.broadcast %290 : vector<2x4x1xf32> to vector<2x4x6xf32>
    %293 = vector.broadcast %291 : vector<1x1x6xf32> to vector<2x4x6xf32>
    %294 = arith.mulf %292, %293 : vector<2x4x6xf32>
    %295 = arith.addf %288, %294 : vector<2x4x6xf32>
    %c2_133 = arith.constant 2 : index
    %c0_134 = arith.constant 0 : index
    %296 = vector.load %arg7[%c2_133, %c0_134] : memref<24x6xf32, #tpu.memory_space<vmem>>, vector<1x6xf32>
    %297 = vector.extract_strided_slice %281 {offsets = [0, 0, 2], sizes = [2, 4, 1], strides = [1, 1, 1]} : vector<2x4x8xf32> to vector<2x4x1xf32>
    %298 = vector.shape_cast %296 : vector<1x6xf32> to vector<1x1x6xf32>
    %299 = vector.broadcast %297 : vector<2x4x1xf32> to vector<2x4x6xf32>
    %300 = vector.broadcast %298 : vector<1x1x6xf32> to vector<2x4x6xf32>
    %301 = arith.mulf %299, %300 : vector<2x4x6xf32>
    %302 = arith.addf %295, %301 : vector<2x4x6xf32>
    %c3_135 = arith.constant 3 : index
    %c0_136 = arith.constant 0 : index
    %303 = vector.load %arg7[%c3_135, %c0_136] : memref<24x6xf32, #tpu.memory_space<vmem>>, vector<1x6xf32>
    %304 = vector.extract_strided_slice %281 {offsets = [0, 0, 3], sizes = [2, 4, 1], strides = [1, 1, 1]} : vector<2x4x8xf32> to vector<2x4x1xf32>
    %305 = vector.shape_cast %303 : vector<1x6xf32> to vector<1x1x6xf32>
    %306 = vector.broadcast %304 : vector<2x4x1xf32> to vector<2x4x6xf32>
    %307 = vector.broadcast %305 : vector<1x1x6xf32> to vector<2x4x6xf32>
    %308 = arith.mulf %306, %307 : vector<2x4x6xf32>
    %309 = arith.addf %302, %308 : vector<2x4x6xf32>
    %c4_137 = arith.constant 4 : index
    %c0_138 = arith.constant 0 : index
    %310 = vector.load %arg7[%c4_137, %c0_138] : memref<24x6xf32, #tpu.memory_space<vmem>>, vector<1x6xf32>
    %311 = vector.extract_strided_slice %281 {offsets = [0, 0, 4], sizes = [2, 4, 1], strides = [1, 1, 1]} : vector<2x4x8xf32> to vector<2x4x1xf32>
    %312 = vector.shape_cast %310 : vector<1x6xf32> to vector<1x1x6xf32>
    %313 = vector.broadcast %311 : vector<2x4x1xf32> to vector<2x4x6xf32>
    %314 = vector.broadcast %312 : vector<1x1x6xf32> to vector<2x4x6xf32>
    %315 = arith.mulf %313, %314 : vector<2x4x6xf32>
    %316 = arith.addf %309, %315 : vector<2x4x6xf32>
    %c5_139 = arith.constant 5 : index
    %c0_140 = arith.constant 0 : index
    %317 = vector.load %arg7[%c5_139, %c0_140] : memref<24x6xf32, #tpu.memory_space<vmem>>, vector<1x6xf32>
    %318 = vector.extract_strided_slice %281 {offsets = [0, 0, 5], sizes = [2, 4, 1], strides = [1, 1, 1]} : vector<2x4x8xf32> to vector<2x4x1xf32>
    %319 = vector.shape_cast %317 : vector<1x6xf32> to vector<1x1x6xf32>
    %320 = vector.broadcast %318 : vector<2x4x1xf32> to vector<2x4x6xf32>
    %321 = vector.broadcast %319 : vector<1x1x6xf32> to vector<2x4x6xf32>
    %322 = arith.mulf %320, %321 : vector<2x4x6xf32>
    %323 = arith.addf %316, %322 : vector<2x4x6xf32>
    %c6_141 = arith.constant 6 : index
    %c0_142 = arith.constant 0 : index
    %324 = vector.load %arg7[%c6_141, %c0_142] : memref<24x6xf32, #tpu.memory_space<vmem>>, vector<1x6xf32>
    %325 = vector.extract_strided_slice %281 {offsets = [0, 0, 6], sizes = [2, 4, 1], strides = [1, 1, 1]} : vector<2x4x8xf32> to vector<2x4x1xf32>
    %326 = vector.shape_cast %324 : vector<1x6xf32> to vector<1x1x6xf32>
    %327 = vector.broadcast %325 : vector<2x4x1xf32> to vector<2x4x6xf32>
    %328 = vector.broadcast %326 : vector<1x1x6xf32> to vector<2x4x6xf32>
    %329 = arith.mulf %327, %328 : vector<2x4x6xf32>
    %330 = arith.addf %323, %329 : vector<2x4x6xf32>
    %c7_143 = arith.constant 7 : index
    %c0_144 = arith.constant 0 : index
    %331 = vector.load %arg7[%c7_143, %c0_144] : memref<24x6xf32, #tpu.memory_space<vmem>>, vector<1x6xf32>
    %332 = vector.extract_strided_slice %281 {offsets = [0, 0, 7], sizes = [2, 4, 1], strides = [1, 1, 1]} : vector<2x4x8xf32> to vector<2x4x1xf32>
    %333 = vector.shape_cast %331 : vector<1x6xf32> to vector<1x1x6xf32>
    %334 = vector.broadcast %332 : vector<2x4x1xf32> to vector<2x4x6xf32>
    %335 = vector.broadcast %333 : vector<1x1x6xf32> to vector<2x4x6xf32>
    %336 = arith.mulf %334, %335 : vector<2x4x6xf32>
    %337 = arith.addf %330, %336 : vector<2x4x6xf32>
    %c0_145 = arith.constant 0 : index
    %c1_146 = arith.constant 1 : index
    %c0_147 = arith.constant 0 : index
    %338 = vector.load %arg13[%c0_145, %c1_146, %c0_147] : memref<2x18x8xf32, #tpu.memory_space<vmem>>, vector<2x4x8xf32>
    %c8_148 = arith.constant 8 : index
    %c0_149 = arith.constant 0 : index
    %339 = vector.load %arg7[%c8_148, %c0_149] : memref<24x6xf32, #tpu.memory_space<vmem>>, vector<1x6xf32>
    %340 = vector.extract_strided_slice %338 {offsets = [0, 0, 0], sizes = [2, 4, 1], strides = [1, 1, 1]} : vector<2x4x8xf32> to vector<2x4x1xf32>
    %341 = vector.shape_cast %339 : vector<1x6xf32> to vector<1x1x6xf32>
    %342 = vector.broadcast %340 : vector<2x4x1xf32> to vector<2x4x6xf32>
    %343 = vector.broadcast %341 : vector<1x1x6xf32> to vector<2x4x6xf32>
    %344 = arith.mulf %342, %343 : vector<2x4x6xf32>
    %345 = arith.addf %337, %344 : vector<2x4x6xf32>
    %c9_150 = arith.constant 9 : index
    %c0_151 = arith.constant 0 : index
    %346 = vector.load %arg7[%c9_150, %c0_151] : memref<24x6xf32, #tpu.memory_space<vmem>>, vector<1x6xf32>
    %347 = vector.extract_strided_slice %338 {offsets = [0, 0, 1], sizes = [2, 4, 1], strides = [1, 1, 1]} : vector<2x4x8xf32> to vector<2x4x1xf32>
    %348 = vector.shape_cast %346 : vector<1x6xf32> to vector<1x1x6xf32>
    %349 = vector.broadcast %347 : vector<2x4x1xf32> to vector<2x4x6xf32>
    %350 = vector.broadcast %348 : vector<1x1x6xf32> to vector<2x4x6xf32>
    %351 = arith.mulf %349, %350 : vector<2x4x6xf32>
    %352 = arith.addf %345, %351 : vector<2x4x6xf32>
    %c10_152 = arith.constant 10 : index
    %c0_153 = arith.constant 0 : index
    %353 = vector.load %arg7[%c10_152, %c0_153] : memref<24x6xf32, #tpu.memory_space<vmem>>, vector<1x6xf32>
    %354 = vector.extract_strided_slice %338 {offsets = [0, 0, 2], sizes = [2, 4, 1], strides = [1, 1, 1]} : vector<2x4x8xf32> to vector<2x4x1xf32>
    %355 = vector.shape_cast %353 : vector<1x6xf32> to vector<1x1x6xf32>
    %356 = vector.broadcast %354 : vector<2x4x1xf32> to vector<2x4x6xf32>
    %357 = vector.broadcast %355 : vector<1x1x6xf32> to vector<2x4x6xf32>
    %358 = arith.mulf %356, %357 : vector<2x4x6xf32>
    %359 = arith.addf %352, %358 : vector<2x4x6xf32>
    %c11_154 = arith.constant 11 : index
    %c0_155 = arith.constant 0 : index
    %360 = vector.load %arg7[%c11_154, %c0_155] : memref<24x6xf32, #tpu.memory_space<vmem>>, vector<1x6xf32>
    %361 = vector.extract_strided_slice %338 {offsets = [0, 0, 3], sizes = [2, 4, 1], strides = [1, 1, 1]} : vector<2x4x8xf32> to vector<2x4x1xf32>
    %362 = vector.shape_cast %360 : vector<1x6xf32> to vector<1x1x6xf32>
    %363 = vector.broadcast %361 : vector<2x4x1xf32> to vector<2x4x6xf32>
    %364 = vector.broadcast %362 : vector<1x1x6xf32> to vector<2x4x6xf32>
    %365 = arith.mulf %363, %364 : vector<2x4x6xf32>
    %366 = arith.addf %359, %365 : vector<2x4x6xf32>
    %c12_156 = arith.constant 12 : index
    %c0_157 = arith.constant 0 : index
    %367 = vector.load %arg7[%c12_156, %c0_157] : memref<24x6xf32, #tpu.memory_space<vmem>>, vector<1x6xf32>
    %368 = vector.extract_strided_slice %338 {offsets = [0, 0, 4], sizes = [2, 4, 1], strides = [1, 1, 1]} : vector<2x4x8xf32> to vector<2x4x1xf32>
    %369 = vector.shape_cast %367 : vector<1x6xf32> to vector<1x1x6xf32>
    %370 = vector.broadcast %368 : vector<2x4x1xf32> to vector<2x4x6xf32>
    %371 = vector.broadcast %369 : vector<1x1x6xf32> to vector<2x4x6xf32>
    %372 = arith.mulf %370, %371 : vector<2x4x6xf32>
    %373 = arith.addf %366, %372 : vector<2x4x6xf32>
    %c13_158 = arith.constant 13 : index
    %c0_159 = arith.constant 0 : index
    %374 = vector.load %arg7[%c13_158, %c0_159] : memref<24x6xf32, #tpu.memory_space<vmem>>, vector<1x6xf32>
    %375 = vector.extract_strided_slice %338 {offsets = [0, 0, 5], sizes = [2, 4, 1], strides = [1, 1, 1]} : vector<2x4x8xf32> to vector<2x4x1xf32>
    %376 = vector.shape_cast %374 : vector<1x6xf32> to vector<1x1x6xf32>
    %377 = vector.broadcast %375 : vector<2x4x1xf32> to vector<2x4x6xf32>
    %378 = vector.broadcast %376 : vector<1x1x6xf32> to vector<2x4x6xf32>
    %379 = arith.mulf %377, %378 : vector<2x4x6xf32>
    %380 = arith.addf %373, %379 : vector<2x4x6xf32>
    %c14_160 = arith.constant 14 : index
    %c0_161 = arith.constant 0 : index
    %381 = vector.load %arg7[%c14_160, %c0_161] : memref<24x6xf32, #tpu.memory_space<vmem>>, vector<1x6xf32>
    %382 = vector.extract_strided_slice %338 {offsets = [0, 0, 6], sizes = [2, 4, 1], strides = [1, 1, 1]} : vector<2x4x8xf32> to vector<2x4x1xf32>
    %383 = vector.shape_cast %381 : vector<1x6xf32> to vector<1x1x6xf32>
    %384 = vector.broadcast %382 : vector<2x4x1xf32> to vector<2x4x6xf32>
    %385 = vector.broadcast %383 : vector<1x1x6xf32> to vector<2x4x6xf32>
    %386 = arith.mulf %384, %385 : vector<2x4x6xf32>
    %387 = arith.addf %380, %386 : vector<2x4x6xf32>
    %c15_162 = arith.constant 15 : index
    %c0_163 = arith.constant 0 : index
    %388 = vector.load %arg7[%c15_162, %c0_163] : memref<24x6xf32, #tpu.memory_space<vmem>>, vector<1x6xf32>
    %389 = vector.extract_strided_slice %338 {offsets = [0, 0, 7], sizes = [2, 4, 1], strides = [1, 1, 1]} : vector<2x4x8xf32> to vector<2x4x1xf32>
    %390 = vector.shape_cast %388 : vector<1x6xf32> to vector<1x1x6xf32>
    %391 = vector.broadcast %389 : vector<2x4x1xf32> to vector<2x4x6xf32>
    %392 = vector.broadcast %390 : vector<1x1x6xf32> to vector<2x4x6xf32>
    %393 = arith.mulf %391, %392 : vector<2x4x6xf32>
    %394 = arith.addf %387, %393 : vector<2x4x6xf32>
    %c0_164 = arith.constant 0 : index
    %c2_165 = arith.constant 2 : index
    %c0_166 = arith.constant 0 : index
    %395 = vector.load %arg13[%c0_164, %c2_165, %c0_166] : memref<2x18x8xf32, #tpu.memory_space<vmem>>, vector<2x4x8xf32>
    %c16_167 = arith.constant 16 : index
    %c0_168 = arith.constant 0 : index
    %396 = vector.load %arg7[%c16_167, %c0_168] : memref<24x6xf32, #tpu.memory_space<vmem>>, vector<1x6xf32>
    %397 = vector.extract_strided_slice %395 {offsets = [0, 0, 0], sizes = [2, 4, 1], strides = [1, 1, 1]} : vector<2x4x8xf32> to vector<2x4x1xf32>
    %398 = vector.shape_cast %396 : vector<1x6xf32> to vector<1x1x6xf32>
    %399 = vector.broadcast %397 : vector<2x4x1xf32> to vector<2x4x6xf32>
    %400 = vector.broadcast %398 : vector<1x1x6xf32> to vector<2x4x6xf32>
    %401 = arith.mulf %399, %400 : vector<2x4x6xf32>
    %402 = arith.addf %394, %401 : vector<2x4x6xf32>
    %c17_169 = arith.constant 17 : index
    %c0_170 = arith.constant 0 : index
    %403 = vector.load %arg7[%c17_169, %c0_170] : memref<24x6xf32, #tpu.memory_space<vmem>>, vector<1x6xf32>
    %404 = vector.extract_strided_slice %395 {offsets = [0, 0, 1], sizes = [2, 4, 1], strides = [1, 1, 1]} : vector<2x4x8xf32> to vector<2x4x1xf32>
    %405 = vector.shape_cast %403 : vector<1x6xf32> to vector<1x1x6xf32>
    %406 = vector.broadcast %404 : vector<2x4x1xf32> to vector<2x4x6xf32>
    %407 = vector.broadcast %405 : vector<1x1x6xf32> to vector<2x4x6xf32>
    %408 = arith.mulf %406, %407 : vector<2x4x6xf32>
    %409 = arith.addf %402, %408 : vector<2x4x6xf32>
    %c18_171 = arith.constant 18 : index
    %c0_172 = arith.constant 0 : index
    %410 = vector.load %arg7[%c18_171, %c0_172] : memref<24x6xf32, #tpu.memory_space<vmem>>, vector<1x6xf32>
    %411 = vector.extract_strided_slice %395 {offsets = [0, 0, 2], sizes = [2, 4, 1], strides = [1, 1, 1]} : vector<2x4x8xf32> to vector<2x4x1xf32>
    %412 = vector.shape_cast %410 : vector<1x6xf32> to vector<1x1x6xf32>
    %413 = vector.broadcast %411 : vector<2x4x1xf32> to vector<2x4x6xf32>
    %414 = vector.broadcast %412 : vector<1x1x6xf32> to vector<2x4x6xf32>
    %415 = arith.mulf %413, %414 : vector<2x4x6xf32>
    %416 = arith.addf %409, %415 : vector<2x4x6xf32>
    %c19_173 = arith.constant 19 : index
    %c0_174 = arith.constant 0 : index
    %417 = vector.load %arg7[%c19_173, %c0_174] : memref<24x6xf32, #tpu.memory_space<vmem>>, vector<1x6xf32>
    %418 = vector.extract_strided_slice %395 {offsets = [0, 0, 3], sizes = [2, 4, 1], strides = [1, 1, 1]} : vector<2x4x8xf32> to vector<2x4x1xf32>
    %419 = vector.shape_cast %417 : vector<1x6xf32> to vector<1x1x6xf32>
    %420 = vector.broadcast %418 : vector<2x4x1xf32> to vector<2x4x6xf32>
    %421 = vector.broadcast %419 : vector<1x1x6xf32> to vector<2x4x6xf32>
    %422 = arith.mulf %420, %421 : vector<2x4x6xf32>
    %423 = arith.addf %416, %422 : vector<2x4x6xf32>
    %c20_175 = arith.constant 20 : index
    %c0_176 = arith.constant 0 : index
    %424 = vector.load %arg7[%c20_175, %c0_176] : memref<24x6xf32, #tpu.memory_space<vmem>>, vector<1x6xf32>
    %425 = vector.extract_strided_slice %395 {offsets = [0, 0, 4], sizes = [2, 4, 1], strides = [1, 1, 1]} : vector<2x4x8xf32> to vector<2x4x1xf32>
    %426 = vector.shape_cast %424 : vector<1x6xf32> to vector<1x1x6xf32>
    %427 = vector.broadcast %425 : vector<2x4x1xf32> to vector<2x4x6xf32>
    %428 = vector.broadcast %426 : vector<1x1x6xf32> to vector<2x4x6xf32>
    %429 = arith.mulf %427, %428 : vector<2x4x6xf32>
    %430 = arith.addf %423, %429 : vector<2x4x6xf32>
    %c21_177 = arith.constant 21 : index
    %c0_178 = arith.constant 0 : index
    %431 = vector.load %arg7[%c21_177, %c0_178] : memref<24x6xf32, #tpu.memory_space<vmem>>, vector<1x6xf32>
    %432 = vector.extract_strided_slice %395 {offsets = [0, 0, 5], sizes = [2, 4, 1], strides = [1, 1, 1]} : vector<2x4x8xf32> to vector<2x4x1xf32>
    %433 = vector.shape_cast %431 : vector<1x6xf32> to vector<1x1x6xf32>
    %434 = vector.broadcast %432 : vector<2x4x1xf32> to vector<2x4x6xf32>
    %435 = vector.broadcast %433 : vector<1x1x6xf32> to vector<2x4x6xf32>
    %436 = arith.mulf %434, %435 : vector<2x4x6xf32>
    %437 = arith.addf %430, %436 : vector<2x4x6xf32>
    %c22_179 = arith.constant 22 : index
    %c0_180 = arith.constant 0 : index
    %438 = vector.load %arg7[%c22_179, %c0_180] : memref<24x6xf32, #tpu.memory_space<vmem>>, vector<1x6xf32>
    %439 = vector.extract_strided_slice %395 {offsets = [0, 0, 6], sizes = [2, 4, 1], strides = [1, 1, 1]} : vector<2x4x8xf32> to vector<2x4x1xf32>
    %440 = vector.shape_cast %438 : vector<1x6xf32> to vector<1x1x6xf32>
    %441 = vector.broadcast %439 : vector<2x4x1xf32> to vector<2x4x6xf32>
    %442 = vector.broadcast %440 : vector<1x1x6xf32> to vector<2x4x6xf32>
    %443 = arith.mulf %441, %442 : vector<2x4x6xf32>
    %444 = arith.addf %437, %443 : vector<2x4x6xf32>
    %c23_181 = arith.constant 23 : index
    %c0_182 = arith.constant 0 : index
    %445 = vector.load %arg7[%c23_181, %c0_182] : memref<24x6xf32, #tpu.memory_space<vmem>>, vector<1x6xf32>
    %446 = vector.extract_strided_slice %395 {offsets = [0, 0, 7], sizes = [2, 4, 1], strides = [1, 1, 1]} : vector<2x4x8xf32> to vector<2x4x1xf32>
    %447 = vector.shape_cast %445 : vector<1x6xf32> to vector<1x1x6xf32>
    %448 = vector.broadcast %446 : vector<2x4x1xf32> to vector<2x4x6xf32>
    %449 = vector.broadcast %447 : vector<1x1x6xf32> to vector<2x4x6xf32>
    %450 = arith.mulf %448, %449 : vector<2x4x6xf32>
    %451 = arith.addf %444, %450 : vector<2x4x6xf32>
    %cst_183 = arith.constant dense<0.000000e+00> : vector<2x6xf32>
    %452 = vector.multi_reduction <add>, %451, %cst_183 [1] : vector<2x4x6xf32> to vector<2x6xf32>
    %453 = vector.shape_cast %452 : vector<2x6xf32> to vector<2x1x6xf32>
    %454 = arith.mulf %451, %451 : vector<2x4x6xf32>
    %cst_184 = arith.constant dense<0.000000e+00> : vector<2x6xf32>
    %455 = vector.multi_reduction <add>, %454, %cst_184 [1] : vector<2x4x6xf32> to vector<2x6xf32>
    %456 = vector.shape_cast %455 : vector<2x6xf32> to vector<2x1x6xf32>
    %457 = vector.extract_strided_slice %453 {offsets = [0, 0, 0], sizes = [1, 1, 6], strides = [1, 1, 1]} : vector<2x1x6xf32> to vector<1x1x6xf32>
    %458 = vector.extract_strided_slice %456 {offsets = [0, 0, 0], sizes = [1, 1, 6], strides = [1, 1, 1]} : vector<2x1x6xf32> to vector<1x1x6xf32>
    %459 = vector.extract_strided_slice %453 {offsets = [1, 0, 0], sizes = [1, 1, 6], strides = [1, 1, 1]} : vector<2x1x6xf32> to vector<1x1x6xf32>
    %460 = arith.addf %457, %459 : vector<1x1x6xf32>
    %461 = vector.extract_strided_slice %456 {offsets = [1, 0, 0], sizes = [1, 1, 6], strides = [1, 1, 1]} : vector<2x1x6xf32> to vector<1x1x6xf32>
    %462 = arith.addf %458, %461 : vector<1x1x6xf32>
    %cst_185 = arith.constant 1.250000e-01 : f32
    %463 = vector.broadcast %cst_185 : f32 to vector<1x1x6xf32>
    %464 = arith.mulf %460, %463 : vector<1x1x6xf32>
    %cst_186 = arith.constant 1.250000e-01 : f32
    %465 = vector.broadcast %cst_186 : f32 to vector<1x1x6xf32>
    %466 = arith.mulf %462, %465 : vector<1x1x6xf32>
    %467 = arith.mulf %464, %464 : vector<1x1x6xf32>
    %468 = arith.subf %466, %467 : vector<1x1x6xf32>
    %c0_187 = arith.constant 0 : index
    %c0_188 = arith.constant 0 : index
    %c0_189 = arith.constant 0 : index
    %469 = vector.load %arg8[%c0_187, %c0_188, %c0_189] : memref<1x1x6xf32, #tpu.memory_space<vmem>>, vector<1x1x6xf32>
    %cst_190 = arith.constant 9.99999974E-6 : f32
    %470 = vector.broadcast %cst_190 : f32 to vector<1x1x6xf32>
    %471 = arith.addf %468, %470 : vector<1x1x6xf32>
    %472 = math.rsqrt %471 : vector<1x1x6xf32>
    %473 = arith.mulf %469, %472 : vector<1x1x6xf32>
    %c0_191 = arith.constant 0 : index
    %c0_192 = arith.constant 0 : index
    %c0_193 = arith.constant 0 : index
    %474 = vector.load %arg9[%c0_191, %c0_192, %c0_193] : memref<1x1x6xf32, #tpu.memory_space<vmem>>, vector<1x1x6xf32>
    %475 = arith.mulf %464, %473 : vector<1x1x6xf32>
    %476 = arith.subf %474, %475 : vector<1x1x6xf32>
    %477 = vector.broadcast %473 : vector<1x1x6xf32> to vector<2x4x6xf32>
    %478 = arith.mulf %451, %477 : vector<2x4x6xf32>
    %479 = vector.broadcast %476 : vector<1x1x6xf32> to vector<2x4x6xf32>
    %480 = arith.addf %478, %479 : vector<2x4x6xf32>
    %cst_194 = arith.constant 0.000000e+00 : f32
    %481 = vector.broadcast %cst_194 : f32 to vector<2x4x6xf32>
    %482 = arith.maximumf %480, %481 : vector<2x4x6xf32>
    %c0_195 = arith.constant 0 : index
    %c1_196 = arith.constant 1 : index
    %c0_197 = arith.constant 0 : index
    %483 = vector.load %arg13[%c0_195, %c1_196, %c0_197] : memref<2x18x8xf32, #tpu.memory_space<vmem>>, vector<2x4x6xf32>
    tpu.vector_store %arg13[%c0_195, %c1_196, %c0_197], %482 {strides = array<i32>} : memref<2x18x8xf32, #tpu.memory_space<vmem>>, vector<2x4x6xf32>,
    %c0_198 = arith.constant 0 : index
    %c0_199 = arith.constant 0 : index
    %c0_200 = arith.constant 0 : index
    %484 = tpu.strided_load %arg13[%c0_198, %c0_199, %c0_200] {strides = array<i32: 1, 2, 1>} : memref<2x18x8xf32, #tpu.memory_space<vmem>>, vector<2x2x6xf32>
    %c0_201 = arith.constant 0 : index
    %c1_202 = arith.constant 1 : index
    %c0_203 = arith.constant 0 : index
    %485 = tpu.strided_load %arg13[%c0_201, %c1_202, %c0_203] {strides = array<i32: 1, 2, 1>} : memref<2x18x8xf32, #tpu.memory_space<vmem>>, vector<2x2x6xf32>
    %c0_204 = arith.constant 0 : index
    %c2_205 = arith.constant 2 : index
    %c0_206 = arith.constant 0 : index
    %486 = tpu.strided_load %arg13[%c0_204, %c2_205, %c0_206] {strides = array<i32: 1, 2, 1>} : memref<2x18x8xf32, #tpu.memory_space<vmem>>, vector<2x2x6xf32>
    %487 = arith.maximumf %484, %485 : vector<2x2x6xf32>
    %488 = arith.maximumf %487, %486 : vector<2x2x6xf32>
    %cst_207 = arith.constant dense<0.000000e+00> : vector<2x6xf32>
    %489 = vector.multi_reduction <add>, %488, %cst_207 [1] : vector<2x2x6xf32> to vector<2x6xf32>
    %490 = vector.shape_cast %489 : vector<2x6xf32> to vector<2x1x6xf32>
    %cst_208 = arith.constant 5.000000e-01 : f32
    %491 = vector.broadcast %cst_208 : f32 to vector<2x1x6xf32>
    %492 = arith.mulf %490, %491 : vector<2x1x6xf32>
    %c0_209 = arith.constant 0 : index
    %c0_210 = arith.constant 0 : index
    %493 = vector.load %arg10[%c0_209, %c0_210] : memref<1x6xf32, #tpu.memory_space<vmem>>, vector<1x6xf32>
    %c0_211 = arith.constant 0 : index
    %c0_212 = arith.constant 0 : index
    %494 = vector.load %arg11[%c0_211, %c0_212] : memref<1x1xf32, #tpu.memory_space<vmem>>, vector<1x1xf32>
    %495 = vector.shape_cast %493 : vector<1x6xf32> to vector<1x1x6xf32>
    %496 = vector.broadcast %495 : vector<1x1x6xf32> to vector<2x1x6xf32>
    %497 = arith.mulf %492, %496 : vector<2x1x6xf32>
    %cst_213 = arith.constant dense<0.000000e+00> : vector<2x1xf32>
    %498 = vector.multi_reduction <add>, %497, %cst_213 [2] : vector<2x1x6xf32> to vector<2x1xf32>
    %499 = vector.shape_cast %498 : vector<2x1xf32> to vector<2x1x1xf32>
    %500 = vector.shape_cast %494 : vector<1x1xf32> to vector<1x1x1xf32>
    %501 = vector.broadcast %500 : vector<1x1x1xf32> to vector<2x1x1xf32>
    %502 = arith.addf %499, %501 : vector<2x1x1xf32>
    %c0_214 = arith.constant 0 : index
    %c0_215 = arith.constant 0 : index
    %c0_216 = arith.constant 0 : index
    %503 = vector.load %arg12[%c0_214, %c0_215, %c0_216] : memref<2x1x1xf32, #tpu.memory_space<vmem>>, vector<2x1x1xf32>
    tpu.vector_store %arg12[%c0_214, %c0_215, %c0_216], %502 {strides = array<i32>} : memref<2x1x1xf32, #tpu.memory_space<vmem>>, vector<2x1x1xf32>,
    return
  }
}

</mosaic_0001>

<llo_original>
// kernel: tpu_custom_call.1
$region0: #{tpu_custom_call.1}
  #allocation0 [shape = 'u32[]', space=smem, size = 0x4, offset = 0x4, fixed_abs, tag = 'smem constant byte address 0x4 - core index']
  #allocation1 [shape = 'u32[72,128]{1,0:T(1,128)}', space=vmem, size = 0x9000, scoped, tag = 'internal scratch']
  #allocation2 [shape = 'f32[2,18,8]{2,1,0:T(8,128)}', space=vmem, size = 0x6000, scoped, tag = 'scratch operand']
  #allocation3 [shape = 'f32[1,1]{1,0:T(1,128)S(1)}', space=vmem, size = 0x200, scoped, tag = 'scoped memory for tpu_custom_call.1']
  %s0 = inlined_call_operand.vmem [shape: f32[2,16,1], index: 0, kind: input, shape index: {}]
  %s1 = inlined_call_operand.vmem [shape: f32[3,8], index: 1, kind: input, shape index: {}]
  %s2 = inlined_call_operand.vmem [shape: f32[1,1,8], index: 2, kind: input, shape index: {}]
  %s3 = inlined_call_operand.vmem [shape: f32[1,1,8], index: 3, kind: input, shape index: {}]
  %s4 = inlined_call_operand.vmem [shape: f32[24,8], index: 4, kind: input, shape index: {}]
  %s5 = inlined_call_operand.vmem [shape: f32[1,1,8], index: 5, kind: input, shape index: {}]
  %s6 = inlined_call_operand.vmem [shape: f32[1,1,8], index: 6, kind: input, shape index: {}]
  %s7 = inlined_call_operand.vmem [shape: f32[24,6], index: 7, kind: input, shape index: {}]
  %s8 = inlined_call_operand.vmem [shape: f32[1,1,6], index: 8, kind: input, shape index: {}]
  %s9 = inlined_call_operand.vmem [shape: f32[1,1,6], index: 9, kind: input, shape index: {}]
  %s10 = inlined_call_operand.vmem [shape: f32[1,6], index: 10, kind: input, shape index: {}]
  %s11 = inlined_call_operand.<no memory space> [shape: f32[1,1], index: 11, kind: input, shape index: {}]
  %s12 = inlined_call_operand.vmem [shape: f32[2,1,1], index: 12, kind: output, shape index: {}]
  %s13 = sld [smem:[#allocation0]]
  $region58: #{tpu_custom_call.1} parent=0
    _
  %s15 = ssub.s32 1, %s13
  %s16 = scalar_select 0, %s15, %s13
  %v17 = vstv %s11
  %18 = vst [vmem:[#allocation3] sm:$0x1] %v17
  // Predicated region
  $region2: #{tpu_custom_call.1} parent=0 // pred_check
    _
  $region3: #{tpu_custom_call.1} parent=0 // pred_check_branch
    %20 = sbr.rel (0) target = $region5
  $region4: #{tpu_custom_call.1} parent=0 // pred_region
    _
  $region5: #{tpu_custom_call.1} parent=0 // pred_fallthru
    _
  // Predicated region
  $region6: #{tpu_custom_call.1} parent=0 // pred_check
    _
  $region7: #{tpu_custom_call.1} parent=0 // pred_check_branch
    %22 = sbr.rel (0) target = $region9
  $region8: #{tpu_custom_call.1} parent=0 // pred_region
    _
  $region9: #{tpu_custom_call.1} parent=0 // pred_fallthru
    _
  // Predicated region
  $region10: #{tpu_custom_call.1} parent=0 // pred_check
    _
  $region11: #{tpu_custom_call.1} parent=0 // pred_check_branch
    %24 = sbr.rel (0) target = $region13
  $region12: #{tpu_custom_call.1} parent=0 // pred_region
    _
  $region13: #{tpu_custom_call.1} parent=0 // pred_fallthru
    _
  // Predicated region
  $region14: #{tpu_custom_call.1} parent=0 // pred_check
    _
  $region15: #{tpu_custom_call.1} parent=0 // pred_check_branch
    %26 = sbr.rel (0) target = $region17
  $region16: #{tpu_custom_call.1} parent=0 // pred_region
    _
  $region17: #{tpu_custom_call.1} parent=0 // pred_fallthru
    _
  // Predicated region
  $region18: #{tpu_custom_call.1} parent=0 // pred_check
    _
  $region19: #{tpu_custom_call.1} parent=0 // pred_check_branch
    %28 = sbr.rel (0) target = $region21
  $region20: #{tpu_custom_call.1} parent=0 // pred_region
    _
  $region21: #{tpu_custom_call.1} parent=0 // pred_fallthru
    _
  // Predicated region
  $region22: #{tpu_custom_call.1} parent=0 // pred_check
    _
  $region23: #{tpu_custom_call.1} parent=0 // pred_check_branch
    %30 = sbr.rel (0) target = $region25
  $region24: #{tpu_custom_call.1} parent=0 // pred_region
    _
  $region25: #{tpu_custom_call.1} parent=0 // pred_fallthru
    _
  // Predicated region
  $region26: #{tpu_custom_call.1} parent=0 // pred_check
    _
  $region27: #{tpu_custom_call.1} parent=0 // pred_check_branch
    %32 = sbr.rel (0) target = $region29
  $region28: #{tpu_custom_call.1} parent=0 // pred_region
    _
  $region29: #{tpu_custom_call.1} parent=0 // pred_fallthru
    _
  // Predicated region
  $region30: #{tpu_custom_call.1} parent=0 // pred_check
    _
  $region31: #{tpu_custom_call.1} parent=0 // pred_check_branch
    %34 = sbr.rel (0) target = $region33
  $region32: #{tpu_custom_call.1} parent=0 // pred_region
    _
  $region33: #{tpu_custom_call.1} parent=0 // pred_fallthru
    _
  // Predicated region
  $region34: #{tpu_custom_call.1} parent=0 // pred_check
    _
  $region35: #{tpu_custom_call.1} parent=0 // pred_check_branch
    %36 = sbr.rel (0) target = $region37
  $region36: #{tpu_custom_call.1} parent=0 // pred_region
    _
  $region37: #{tpu_custom_call.1} parent=0 // pred_fallthru
    _
  // Predicated region
  $region38: #{tpu_custom_call.1} parent=0 // pred_check
    _
  $region39: #{tpu_custom_call.1} parent=0 // pred_check_branch
    %38 = sbr.rel (0) target = $region41
  $region40: #{tpu_custom_call.1} parent=0 // pred_region
    _
  $region41: #{tpu_custom_call.1} parent=0 // pred_fallthru
    _
  // Predicated region
  $region42: #{tpu_custom_call.1} parent=0 // pred_check
    _
  $region43: #{tpu_custom_call.1} parent=0 // pred_check_branch
    %40 = sbr.rel (0) target = $region45
  $region44: #{tpu_custom_call.1} parent=0 // pred_region
    _
  $region45: #{tpu_custom_call.1} parent=0 // pred_fallthru
    _
  // Predicated region
  $region46: #{tpu_custom_call.1} parent=0 // pred_check
    _
  $region47: #{tpu_custom_call.1} parent=0 // pred_check_branch
    %42 = sbr.rel (0) target = $region49
  $region48: #{tpu_custom_call.1} parent=0 // pred_region
    _
  $region49: #{tpu_custom_call.1} parent=0 // pred_fallthru
    _
  %vm43 = vcmask 57344
  %44 = vst.msk [vmem:[#allocation2] sm:$0x1] %vm43, 0.0
  %45 = vst.msk [vmem:[#allocation2 + $0x18] sm:$0x1] %vm43, 0.0
  %v46 = vld [vmem:[%s0] sm:$0xff]
  %v47 = vld [vmem:[%s0 + $0x8] sm:$0xff]
  %v48 = vld [vmem:[%s0 + $0x10] sm:$0xff]
  %v49 = vld [vmem:[%s0 + $0x18] sm:$0xff]
  %50 = vst.msk [vmem:[#allocation2 + $0x11] sm:$0x1] %vm43, 0.0
  %51 = vst.msk [vmem:[#allocation2 + $0x29] sm:$0x1] %vm43, 0.0
  %vm52 = vcmask 7168
  %53 = vst.msk [vmem:[#allocation2 + $0x1] sm:$0xff] %vm52, %v46
  %54 = vst.msk [vmem:[#allocation2 + $0x9] sm:$0xff] %vm52, %v47
  %55 = vst.msk [vmem:[#allocation2 + $0x19] sm:$0xff] %vm52, %v48
  %56 = vst.msk [vmem:[#allocation2 + $0x21] sm:$0xff] %vm52, %v49
  %v57 = vld [vmem:[#allocation2] sm:$0xff]
  %v58 = vld [vmem:[#allocation2 + $0x8] sm:$0xff]
  %v59 = vld [vmem:[#allocation2 + $0x18] sm:$0xff]
  %v60 = vld [vmem:[#allocation2 + $0x20] sm:$0xff]
  %v61 = vld [vmem:[%s1] sm:$0x1]
  %63 = vset.pattern.permute.xlu0 0
  %64 = vperm.xlu0 %63, %v57
  %v65 = vpop.permute.xlu0 %64
  %68 = vset.pattern.permute.xlu0 0
  %69 = vperm.xlu0 %68, %v58
  %v70 = vpop.permute.xlu0 %69
  %73 = vset.pattern.permute.xlu0 0
  %74 = vperm.xlu0 %73, %v59
  %v75 = vpop.permute.xlu0 %74
  %78 = vset.pattern.permute.xlu0 0
  %79 = vperm.xlu0 %78, %v60
  %v80 = vpop.permute.xlu0 %79
  %v82 = vperm.slane %v61, 0
  %v83 = vmul.f32 %v65, %v82
  %v84 = vmul.f32 %v70, %v82
  %v85 = vmul.f32 %v75, %v82
  %v86 = vmul.f32 %v80, %v82
  %v87 = vadd.f32 %v83, 0.0
  %v88 = vadd.f32 %v84, 0.0
  %v89 = vadd.f32 %v85, 0.0
  %v90 = vadd.f32 %v86, 0.0
  %v91 = vld [vmem:[#allocation2 + $0x1] sm:$0xff]
  %v92 = vld [vmem:[#allocation2 + $0x9] sm:$0xff]
  %v93 = vld [vmem:[#allocation2 + $0x19] sm:$0xff]
  %v94 = vld [vmem:[#allocation2 + $0x21] sm:$0xff]
  %v95 = vld [vmem:[%s1 + $0x1] sm:$0x1]
  %97 = vset.pattern.permute.xlu0 0
  %98 = vperm.xlu0 %97, %v91
  %v99 = vpop.permute.xlu0 %98
  %102 = vset.pattern.permute.xlu0 0
  %103 = vperm.xlu0 %102, %v92
  %v104 = vpop.permute.xlu0 %103
  %107 = vset.pattern.permute.xlu0 0
  %108 = vperm.xlu0 %107, %v93
  %v109 = vpop.permute.xlu0 %108
  %112 = vset.pattern.permute.xlu0 0
  %113 = vperm.xlu0 %112, %v94
  %v114 = vpop.permute.xlu0 %113
  %v116 = vperm.slane %v95, 0
  %v117 = vmul.f32 %v99, %v116
  %v118 = vmul.f32 %v104, %v116
  %v119 = vmul.f32 %v109, %v116
  %v120 = vmul.f32 %v114, %v116
  %v121 = vadd.f32 %v87, %v117
  %v122 = vadd.f32 %v88, %v118
  %v123 = vadd.f32 %v89, %v119
  %v124 = vadd.f32 %v90, %v120
  %v125 = vld [vmem:[#allocation2 + $0x2] sm:$0xff]
  %v126 = vld [vmem:[#allocation2 + $0xa] sm:$0xff]
  %v127 = vld [vmem:[#allocation2 + $0x1a] sm:$0xff]
  %v128 = vld [vmem:[#allocation2 + $0x22] sm:$0xff]
  %v129 = vld [vmem:[%s1 + $0x2] sm:$0x1]
  %131 = vset.pattern.permute.xlu0 0
  %132 = vperm.xlu0 %131, %v125
  %v133 = vpop.permute.xlu0 %132
  %136 = vset.pattern.permute.xlu0 0
  %137 = vperm.xlu0 %136, %v126
  %v138 = vpop.permute.xlu0 %137
  %141 = vset.pattern.permute.xlu0 0
  %142 = vperm.xlu0 %141, %v127
  %v143 = vpop.permute.xlu0 %142
  %146 = vset.pattern.permute.xlu0 0
  %147 = vperm.xlu0 %146, %v128
  %v148 = vpop.permute.xlu0 %147
  %v150 = vperm.slane %v129, 0
  %v151 = vmul.f32 %v133, %v150
  %v152 = vmul.f32 %v138, %v150
  %v153 = vmul.f32 %v143, %v150
  %v154 = vmul.f32 %v148, %v150
  %v155 = vadd.f32 %v121, %v151
  %v156 = vadd.f32 %v122, %v152
  %v157 = vadd.f32 %v123, %v153
  %v158 = vadd.f32 %v124, %v154
  %vm159 = vcmask 64512
  %v160 = vsel %vm159, %v155, 0.0
  %v161 = vsel %vm159, %v156, 0.0
  %v162 = vadd.f32 %v160, %v161
  %v163 = vrot.slane %v162, 4
  %v164 = vadd.f32 %v162, %v163
  %v165 = vrot.slane %v164, 2
  %v166 = vadd.f32 %v164, %v165
  %v167 = vrot.slane %v166, 1
  %v168 = vadd.f32 %v166, %v167
  %v169 = vsel %vm159, %v157, 0.0
  %v170 = vsel %vm159, %v158, 0.0
  %v171 = vadd.f32 %v169, %v170
  %v172 = vrot.slane %v171, 4
  %v173 = vadd.f32 %v171, %v172
  %v174 = vrot.slane %v173, 2
  %v175 = vadd.f32 %v173, %v174
  %v176 = vrot.slane %v175, 1
  %v177 = vadd.f32 %v175, %v176
  %v178 = vmul.f32 %v155, %v155
  %v179 = vmul.f32 %v156, %v156
  %v180 = vmul.f32 %v157, %v157
  %v181 = vmul.f32 %v158, %v158
  %v182 = vsel %vm159, %v178, 0.0
  %v183 = vsel %vm159, %v179, 0.0
  %v184 = vadd.f32 %v182, %v183
  %v185 = vrot.slane %v184, 4
  %v186 = vadd.f32 %v184, %v185
  %v187 = vrot.slane %v186, 2
  %v188 = vadd.f32 %v186, %v187
  %v189 = vrot.slane %v188, 1
  %v190 = vadd.f32 %v188, %v189
  %v191 = vsel %vm159, %v180, 0.0
  %v192 = vsel %vm159, %v181, 0.0
  %v193 = vadd.f32 %v191, %v192
  %v194 = vrot.slane %v193, 4
  %v195 = vadd.f32 %v193, %v194
  %v196 = vrot.slane %v195, 2
  %v197 = vadd.f32 %v195, %v196
  %v198 = vrot.slane %v197, 1
  %v199 = vadd.f32 %v197, %v198
  %v200 = vadd.f32 %v168, %v177
  %v201 = vadd.f32 %v190, %v199
  %v202 = vmul.f32 %v200, 0.03125
  %v203 = vmul.f32 %v201, 0.03125
  %v204 = vmul.f32 %v202, %v202
  %v205 = vsub.f32 %v203, %v204
  %v206 = vld [vmem:[%s2] sm:$0x1]
  %v207 = vadd.f32 %v205, 1e-05
  %v208 = vrsqrt.pop %v207
  %v209 = vmul.f32 %v208, %v207
  %v210 = vmul.f32 %v209, %v208
  %v211 = vmul.f32 0.5, %v210
  %v212 = vsub.f32 1.5, %v211
  %v213 = vmul.f32 %v208, %v212
  %vm214 = vweird.f32 %v207
  %vm215 = vweird.f32 %v208
  %vm216 = vmor %vm214, %vm215
  %v217 = vsel %vm216, %v208, %v213
  %v218 = vmul.f32 %v206, %v217
  %v219 = vld [vmem:[%s3] sm:$0x1]
  %v220 = vmul.f32 %v202, %v218
  %v221 = vsub.f32 %v219, %v220
  %v223 = vperm.slane %v218, 0
  %v225 = vmul.f32 %v155, %v223
  %v226 = vmul.f32 %v156, %v223
  %v227 = vmul.f32 %v157, %v223
  %v228 = vmul.f32 %v158, %v223
  %v230 = vperm.slane %v221, 0
  %v232 = vadd.f32 %v225, %v230
  %v233 = vadd.f32 %v226, %v230
  %v234 = vadd.f32 %v227, %v230
  %v235 = vadd.f32 %v228, %v230
  %v236 = vmax.f32 %v232, 0.0
  %v237 = vmax.f32 %v233, 0.0
  %v238 = vmax.f32 %v234, 0.0
  %v239 = vmax.f32 %v235, 0.0
  %240 = vst.msk [vmem:[#allocation2 + $0x1] sm:$0xff] %vm159, %v236
  %241 = vst.msk [vmem:[#allocation2 + $0x9] sm:$0xff] %vm159, %v237
  %242 = vst.msk [vmem:[#allocation2 + $0x19] sm:$0xff] %vm159, %v238
  %243 = vst.msk [vmem:[#allocation2 + $0x21] sm:$0xff] %vm159, %v239
  %v244 = vld [vmem:[#allocation2] ss:$2 sm:$0xff]
  %s245 = scalar_lea.vmem [#allocation2], 24
  %v246 = vld [vmem:[%s245] ss:$2 sm:$0xff]
  %s247 = scalar_lea.vmem [#allocation2], 1
  %v248 = vld [vmem:[%s247] ss:$2 sm:$0xff]
  %s249 = scalar_lea.vmem [#allocation2], 25
  %v250 = vld [vmem:[%s249] ss:$2 sm:$0xff]
  %s251 = scalar_lea.vmem [#allocation2], 2
  %v252 = vld [vmem:[%s251] ss:$2 sm:$0xff]
  %s253 = scalar_lea.vmem [#allocation2], 26
  %v254 = vld [vmem:[%s253] ss:$2 sm:$0xff]
  %v255 = vmax.f32 %v244, %v248
  %v256 = vmax.f32 %v246, %v250
  %v257 = vmax.f32 %v255, %v252
  %v258 = vmax.f32 %v256, %v254
  %259 = vst.msk [vmem:[#allocation2 + $0x9] sm:$0x1] %vm43, 0.0
  %260 = vst.msk [vmem:[#allocation2 + $0x21] sm:$0x1] %vm43, 0.0
  %261 = vst.msk [vmem:[#allocation2 + $0x1] sm:$0xff] %vm159, %v257
  %262 = vst.msk [vmem:[#allocation2 + $0x19] sm:$0xff] %vm159, %v258
  %v263 = vld [vmem:[#allocation2] sm:$0xff]
  %v264 = vld [vmem:[#allocation2 + $0x18] sm:$0xff]
  %v265 = vld [vmem:[%s4] sm:$0x1]
  %267 = vset.pattern.permute.xlu0 0
  %268 = vperm.xlu0 %267, %v263
  %v269 = vpop.permute.xlu0 %268
  %272 = vset.pattern.permute.xlu0 0
  %273 = vperm.xlu0 %272, %v264
  %v274 = vpop.permute.xlu0 %273
  %v276 = vperm.slane %v265, 0
  %v277 = vmul.f32 %v269, %v276
  %v278 = vmul.f32 %v274, %v276
  %v279 = vadd.f32 %v277, 0.0
  %v280 = vadd.f32 %v278, 0.0
  %v281 = vld [vmem:[%s4 + $0x1] sm:$0x1]
  %282 = vset.pattern.permute.xlu0 1
  %283 = vperm.xlu0 %282, %v263
  %v284 = vpop.permute.xlu0 %283
  %286 = vset.pattern.permute.xlu0 1
  %287 = vperm.xlu0 %286, %v264
  %v288 = vpop.permute.xlu0 %287
  %v290 = vperm.slane %v281, 0
  %v291 = vmul.f32 %v284, %v290
  %v292 = vmul.f32 %v288, %v290
  %v293 = vadd.f32 %v279, %v291
  %v294 = vadd.f32 %v280, %v292
  %v295 = vld [vmem:[%s4 + $0x2] sm:$0x1]
  %296 = vset.pattern.permute.xlu0 2
  %297 = vperm.xlu0 %296, %v263
  %v298 = vpop.permute.xlu0 %297
  %300 = vset.pattern.permute.xlu0 2
  %301 = vperm.xlu0 %300, %v264
  %v302 = vpop.permute.xlu0 %301
  %v304 = vperm.slane %v295, 0
  %v305 = vmul.f32 %v298, %v304
  %v306 = vmul.f32 %v302, %v304
  %v307 = vadd.f32 %v293, %v305
  %v308 = vadd.f32 %v294, %v306
  %v309 = vld [vmem:[%s4 + $0x3] sm:$0x1]
  %310 = vset.pattern.permute.xlu0 3
  %311 = vperm.xlu0 %310, %v263
  %v312 = vpop.permute.xlu0 %311
  %314 = vset.pattern.permute.xlu0 3
  %315 = vperm.xlu0 %314, %v264
  %v316 = vpop.permute.xlu0 %315
  %v318 = vperm.slane %v309, 0
  %v319 = vmul.f32 %v312, %v318
  %v320 = vmul.f32 %v316, %v318
  %v321 = vadd.f32 %v307, %v319
  %v322 = vadd.f32 %v308, %v320
  %v323 = vld [vmem:[%s4 + $0x4] sm:$0x1]
  %324 = vset.pattern.permute.xlu0 4
  %325 = vperm.xlu0 %324, %v263
  %v326 = vpop.permute.xlu0 %325
  %328 = vset.pattern.permute.xlu0 4
  %329 = vperm.xlu0 %328, %v264
  %v330 = vpop.permute.xlu0 %329
  %v332 = vperm.slane %v323, 0
  %v333 = vmul.f32 %v326, %v332
  %v334 = vmul.f32 %v330, %v332
  %v335 = vadd.f32 %v321, %v333
  %v336 = vadd.f32 %v322, %v334
  %v337 = vld [vmem:[%s4 + $0x5] sm:$0x1]
  %338 = vset.pattern.permute.xlu0 5
  %339 = vperm.xlu0 %338, %v263
  %v340 = vpop.permute.xlu0 %339
  %342 = vset.pattern.permute.xlu0 5
  %343 = vperm.xlu0 %342, %v264
  %v344 = vpop.permute.xlu0 %343
  %v346 = vperm.slane %v337, 0
  %v347 = vmul.f32 %v340, %v346
  %v348 = vmul.f32 %v344, %v346
  %v349 = vadd.f32 %v335, %v347
  %v350 = vadd.f32 %v336, %v348
  %v351 = vld [vmem:[%s4 + $0x6] sm:$0x1]
  %352 = vset.pattern.permute.xlu0 6
  %353 = vperm.xlu0 %352, %v263
  %v354 = vpop.permute.xlu0 %353
  %356 = vset.pattern.permute.xlu0 6
  %357 = vperm.xlu0 %356, %v264
  %v358 = vpop.permute.xlu0 %357
  %v360 = vperm.slane %v351, 0
  %v361 = vmul.f32 %v354, %v360
  %v362 = vmul.f32 %v358, %v360
  %v363 = vadd.f32 %v349, %v361
  %v364 = vadd.f32 %v350, %v362
  %v365 = vld [vmem:[%s4 + $0x7] sm:$0x1]
  %366 = vset.pattern.permute.xlu0 7
  %367 = vperm.xlu0 %366, %v263
  %v368 = vpop.permute.xlu0 %367
  %370 = vset.pattern.permute.xlu0 7
  %371 = vperm.xlu0 %370, %v264
  %v372 = vpop.permute.xlu0 %371
  %v374 = vperm.slane %v365, 0
  %v375 = vmul.f32 %v368, %v374
  %v376 = vmul.f32 %v372, %v374
  %v377 = vadd.f32 %v363, %v375
  %v378 = vadd.f32 %v364, %v376
  %v379 = vld [vmem:[#allocation2 + $0x1] sm:$0xff]
  %v380 = vld [vmem:[#allocation2 + $0x19] sm:$0xff]
  %v381 = vld [vmem:[%s4 + $0x8] sm:$0x1]
  %383 = vset.pattern.permute.xlu0 0
  %384 = vperm.xlu0 %383, %v379
  %v385 = vpop.permute.xlu0 %384
  %388 = vset.pattern.permute.xlu0 0
  %389 = vperm.xlu0 %388, %v380
  %v390 = vpop.permute.xlu0 %389
  %v392 = vperm.slane %v381, 0
  %v393 = vmul.f32 %v385, %v392
  %v394 = vmul.f32 %v390, %v392
  %v395 = vadd.f32 %v377, %v393
  %v396 = vadd.f32 %v378, %v394
  %v397 = vld [vmem:[%s4 + $0x9] sm:$0x1]
  %398 = vset.pattern.permute.xlu0 1
  %399 = vperm.xlu0 %398, %v379
  %v400 = vpop.permute.xlu0 %399
  %402 = vset.pattern.permute.xlu0 1
  %403 = vperm.xlu0 %402, %v380
  %v404 = vpop.permute.xlu0 %403
  %v406 = vperm.slane %v397, 0
  %v407 = vmul.f32 %v400, %v406
  %v408 = vmul.f32 %v404, %v406
  %v409 = vadd.f32 %v395, %v407
  %v410 = vadd.f32 %v396, %v408
  %v411 = vld [vmem:[%s4 + $0xa] sm:$0x1]
  %412 = vset.pattern.permute.xlu0 2
  %413 = vperm.xlu0 %412, %v379
  %v414 = vpop.permute.xlu0 %413
  %416 = vset.pattern.permute.xlu0 2
  %417 = vperm.xlu0 %416, %v380
  %v418 = vpop.permute.xlu0 %417
  %v420 = vperm.slane %v411, 0
  %v421 = vmul.f32 %v414, %v420
  %v422 = vmul.f32 %v418, %v420
  %v423 = vadd.f32 %v409, %v421
  %v424 = vadd.f32 %v410, %v422
  %v425 = vld [vmem:[%s4 + $0xb] sm:$0x1]
  %426 = vset.pattern.permute.xlu0 3
  %427 = vperm.xlu0 %426, %v379
  %v428 = vpop.permute.xlu0 %427
  %430 = vset.pattern.permute.xlu0 3
  %431 = vperm.xlu0 %430, %v380
  %v432 = vpop.permute.xlu0 %431
  %v434 = vperm.slane %v425, 0
  %v435 = vmul.f32 %v428, %v434
  %v436 = vmul.f32 %v432, %v434
  %v437 = vadd.f32 %v423, %v435
  %v438 = vadd.f32 %v424, %v436
  %v439 = vld [vmem:[%s4 + $0xc] sm:$0x1]
  %440 = vset.pattern.permute.xlu0 4
  %441 = vperm.xlu0 %440, %v379
  %v442 = vpop.permute.xlu0 %441
  %444 = vset.pattern.permute.xlu0 4
  %445 = vperm.xlu0 %444, %v380
  %v446 = vpop.permute.xlu0 %445
  %v448 = vperm.slane %v439, 0
  %v449 = vmul.f32 %v442, %v448
  %v450 = vmul.f32 %v446, %v448
  %v451 = vadd.f32 %v437, %v449
  %v452 = vadd.f32 %v438, %v450
  %v453 = vld [vmem:[%s4 + $0xd] sm:$0x1]
  %454 = vset.pattern.permute.xlu0 5
  %455 = vperm.xlu0 %454, %v379
  %v456 = vpop.permute.xlu0 %455
  %458 = vset.pattern.permute.xlu0 5
  %459 = vperm.xlu0 %458, %v380
  %v460 = vpop.permute.xlu0 %459
  %v462 = vperm.slane %v453, 0
  %v463 = vmul.f32 %v456, %v462
  %v464 = vmul.f32 %v460, %v462
  %v465 = vadd.f32 %v451, %v463
  %v466 = vadd.f32 %v452, %v464
  %v467 = vld [vmem:[%s4 + $0xe] sm:$0x1]
  %468 = vset.pattern.permute.xlu0 6
  %469 = vperm.xlu0 %468, %v379
  %v470 = vpop.permute.xlu0 %469
  %472 = vset.pattern.permute.xlu0 6
  %473 = vperm.xlu0 %472, %v380
  %v474 = vpop.permute.xlu0 %473
  %v476 = vperm.slane %v467, 0
  %v477 = vmul.f32 %v470, %v476
  %v478 = vmul.f32 %v474, %v476
  %v479 = vadd.f32 %v465, %v477
  %v480 = vadd.f32 %v466, %v478
  %v481 = vld [vmem:[%s4 + $0xf] sm:$0x1]
  %482 = vset.pattern.permute.xlu0 7
  %483 = vperm.xlu0 %482, %v379
  %v484 = vpop.permute.xlu0 %483
  %486 = vset.pattern.permute.xlu0 7
  %487 = vperm.xlu0 %486, %v380
  %v488 = vpop.permute.xlu0 %487
  %v490 = vperm.slane %v481, 0
  %v491 = vmul.f32 %v484, %v490
  %v492 = vmul.f32 %v488, %v490
  %v493 = vadd.f32 %v479, %v491
  %v494 = vadd.f32 %v480, %v492
  %v495 = vld [vmem:[#allocation2 + $0x2] sm:$0xff]
  %v496 = vld [vmem:[#allocation2 + $0x1a] sm:$0xff]
  %v497 = vld [vmem:[%s4 + $0x10] sm:$0x1]
  %499 = vset.pattern.permute.xlu0 0
  %500 = vperm.xlu0 %499, %v495
  %v501 = vpop.permute.xlu0 %500
  %504 = vset.pattern.permute.xlu0 0
  %505 = vperm.xlu0 %504, %v496
  %v506 = vpop.permute.xlu0 %505
  %v508 = vperm.slane %v497, 0
  %v509 = vmul.f32 %v501, %v508
  %v510 = vmul.f32 %v506, %v508
  %v511 = vadd.f32 %v493, %v509
  %v512 = vadd.f32 %v494, %v510
  %v513 = vld [vmem:[%s4 + $0x11] sm:$0x1]
  %514 = vset.pattern.permute.xlu0 1
  %515 = vperm.xlu0 %514, %v495
  %v516 = vpop.permute.xlu0 %515
  %518 = vset.pattern.permute.xlu0 1
  %519 = vperm.xlu0 %518, %v496
  %v520 = vpop.permute.xlu0 %519
  %v522 = vperm.slane %v513, 0
  %v523 = vmul.f32 %v516, %v522
  %v524 = vmul.f32 %v520, %v522
  %v525 = vadd.f32 %v511, %v523
  %v526 = vadd.f32 %v512, %v524
  %v527 = vld [vmem:[%s4 + $0x12] sm:$0x1]
  %528 = vset.pattern.permute.xlu0 2
  %529 = vperm.xlu0 %528, %v495
  %v530 = vpop.permute.xlu0 %529
  %532 = vset.pattern.permute.xlu0 2
  %533 = vperm.xlu0 %532, %v496
  %v534 = vpop.permute.xlu0 %533
  %v536 = vperm.slane %v527, 0
  %v537 = vmul.f32 %v530, %v536
  %v538 = vmul.f32 %v534, %v536
  %v539 = vadd.f32 %v525, %v537
  %v540 = vadd.f32 %v526, %v538
  %v541 = vld [vmem:[%s4 + $0x13] sm:$0x1]
  %542 = vset.pattern.permute.xlu0 3
  %543 = vperm.xlu0 %542, %v495
  %v544 = vpop.permute.xlu0 %543
  %546 = vset.pattern.permute.xlu0 3
  %547 = vperm.xlu0 %546, %v496
  %v548 = vpop.permute.xlu0 %547
  %v550 = vperm.slane %v541, 0
  %v551 = vmul.f32 %v544, %v550
  %v552 = vmul.f32 %v548, %v550
  %v553 = vadd.f32 %v539, %v551
  %v554 = vadd.f32 %v540, %v552
  %v555 = vld [vmem:[%s4 + $0x14] sm:$0x1]
  %556 = vset.pattern.permute.xlu0 4
  %557 = vperm.xlu0 %556, %v495
  %v558 = vpop.permute.xlu0 %557
  %560 = vset.pattern.permute.xlu0 4
  %561 = vperm.xlu0 %560, %v496
  %v562 = vpop.permute.xlu0 %561
  %v564 = vperm.slane %v555, 0
  %v565 = vmul.f32 %v558, %v564
  %v566 = vmul.f32 %v562, %v564
  %v567 = vadd.f32 %v553, %v565
  %v568 = vadd.f32 %v554, %v566
  %v569 = vld [vmem:[%s4 + $0x15] sm:$0x1]
  %570 = vset.pattern.permute.xlu0 5
  %571 = vperm.xlu0 %570, %v495
  %v572 = vpop.permute.xlu0 %571
  %574 = vset.pattern.permute.xlu0 5
  %575 = vperm.xlu0 %574, %v496
  %v576 = vpop.permute.xlu0 %575
  %v578 = vperm.slane %v569, 0
  %v579 = vmul.f32 %v572, %v578
  %v580 = vmul.f32 %v576, %v578
  %v581 = vadd.f32 %v567, %v579
  %v582 = vadd.f32 %v568, %v580
  %v583 = vld [vmem:[%s4 + $0x16] sm:$0x1]
  %584 = vset.pattern.permute.xlu0 6
  %585 = vperm.xlu0 %584, %v495
  %v586 = vpop.permute.xlu0 %585
  %588 = vset.pattern.permute.xlu0 6
  %589 = vperm.xlu0 %588, %v496
  %v590 = vpop.permute.xlu0 %589
  %v592 = vperm.slane %v583, 0
  %v593 = vmul.f32 %v586, %v592
  %v594 = vmul.f32 %v590, %v592
  %v595 = vadd.f32 %v581, %v593
  %v596 = vadd.f32 %v582, %v594
  %v597 = vld [vmem:[%s4 + $0x17] sm:$0x1]
  %598 = vset.pattern.permute.xlu0 7
  %599 = vperm.xlu0 %598, %v495
  %v600 = vpop.permute.xlu0 %599
  %602 = vset.pattern.permute.xlu0 7
  %603 = vperm.xlu0 %602, %v496
  %v604 = vpop.permute.xlu0 %603
  %v606 = vperm.slane %v597, 0
  %v607 = vmul.f32 %v600, %v606
  %v608 = vmul.f32 %v604, %v606
  %v609 = vadd.f32 %v595, %v607
  %v610 = vadd.f32 %v596, %v608
  %v611 = vsel %vm159, %v609, 0.0
  %v612 = vrot.slane %v611, 4
  %v613 = vadd.f32 %v611, %v612
  %v614 = vrot.slane %v613, 2
  %v615 = vadd.f32 %v613, %v614
  %v616 = vrot.slane %v615, 1
  %v617 = vadd.f32 %v615, %v616
  %v618 = vsel %vm159, %v610, 0.0
  %v619 = vrot.slane %v618, 4
  %v620 = vadd.f32 %v618, %v619
  %v621 = vrot.slane %v620, 2
  %v622 = vadd.f32 %v620, %v621
  %v623 = vrot.slane %v622, 1
  %v624 = vadd.f32 %v622, %v623
  %v625 = vmul.f32 %v609, %v609
  %v626 = vmul.f32 %v610, %v610
  %v627 = vsel %vm159, %v625, 0.0
  %v628 = vrot.slane %v627, 4
  %v629 = vadd.f32 %v627, %v628
  %v630 = vrot.slane %v629, 2
  %v631 = vadd.f32 %v629, %v630
  %v632 = vrot.slane %v631, 1
  %v633 = vadd.f32 %v631, %v632
  %v634 = vsel %vm159, %v626, 0.0
  %v635 = vrot.slane %v634, 4
  %v636 = vadd.f32 %v634, %v635
  %v637 = vrot.slane %v636, 2
  %v638 = vadd.f32 %v636, %v637
  %v639 = vrot.slane %v638, 1
  %v640 = vadd.f32 %v638, %v639
  %v641 = vadd.f32 %v617, %v624
  %v642 = vadd.f32 %v633, %v640
  %v643 = vmul.f32 %v641, 0.0625
  %v644 = vmul.f32 %v642, 0.0625
  %v645 = vmul.f32 %v643, %v643
  %v646 = vsub.f32 %v644, %v645
  %v647 = vld [vmem:[%s5] sm:$0x1]
  %v648 = vadd.f32 %v646, 1e-05
  %v649 = vrsqrt.pop %v648
  %v650 = vmul.f32 %v649, %v648
  %v651 = vmul.f32 %v650, %v649
  %v652 = vmul.f32 0.5, %v651
  %v653 = vsub.f32 1.5, %v652
  %v654 = vmul.f32 %v649, %v653
  %vm655 = vweird.f32 %v648
  %vm656 = vweird.f32 %v649
  %vm657 = vmor %vm655, %vm656
  %v658 = vsel %vm657, %v649, %v654
  %v659 = vmul.f32 %v647, %v658
  %v660 = vld [vmem:[%s6] sm:$0x1]
  %v661 = vmul.f32 %v643, %v659
  %v662 = vsub.f32 %v660, %v661
  %v664 = vperm.slane %v659, 0
  %v666 = vmul.f32 %v609, %v664
  %v667 = vmul.f32 %v610, %v664
  %v669 = vperm.slane %v662, 0
  %v671 = vadd.f32 %v666, %v669
  %v672 = vadd.f32 %v667, %v669
  %v673 = vmax.f32 %v671, 0.0
  %v674 = vmax.f32 %v672, 0.0
  %675 = vst.msk [vmem:[#allocation2 + $0x1] sm:$0xff] %vm159, %v673
  %676 = vst.msk [vmem:[#allocation2 + $0x19] sm:$0xff] %vm159, %v674
  %v677 = vld [vmem:[#allocation2] ss:$2 sm:$0xf]
  %v678 = vld [vmem:[%s245] ss:$2 sm:$0xf]
  %v679 = vld [vmem:[%s247] ss:$2 sm:$0xf]
  %v680 = vld [vmem:[%s249] ss:$2 sm:$0xf]
  %v681 = vld [vmem:[%s251] ss:$2 sm:$0xf]
  %v682 = vld [vmem:[%s253] ss:$2 sm:$0xf]
  %v683 = vmax.f32 %v677, %v679
  %v684 = vmax.f32 %v678, %v680
  %v685 = vmax.f32 %v683, %v681
  %v686 = vmax.f32 %v684, %v682
  %687 = vst.msk [vmem:[#allocation2 + $0x5] sm:$0x1] %vm43, 0.0
  %688 = vst.msk [vmem:[#allocation2 + $0x1d] sm:$0x1] %vm43, 0.0
  %vm689 = vcmask 60416
  %690 = vst.msk [vmem:[#allocation2 + $0x1] sm:$0xf] %vm689, %v685
  %691 = vst.msk [vmem:[#allocation2 + $0x19] sm:$0xf] %vm689, %v686
  %v692 = vld [vmem:[#allocation2] sm:$0xf]
  %v693 = vld [vmem:[#allocation2 + $0x18] sm:$0xf]
  %v694 = vld [vmem:[%s7] sm:$0x1]
  %696 = vset.pattern.permute.xlu0 0
  %697 = vperm.xlu0 %696, %v692
  %v698 = vpop.permute.xlu0 %697
  %701 = vset.pattern.permute.xlu0 0
  %702 = vperm.xlu0 %701, %v693
  %v703 = vpop.permute.xlu0 %702
  %v705 = vperm.slane %v694, 0
  %v706 = vmul.f32 %v698, %v705
  %v707 = vmul.f32 %v703, %v705
  %v708 = vadd.f32 %v706, 0.0
  %v709 = vadd.f32 %v707, 0.0
  %v710 = vld [vmem:[%s7 + $0x1] sm:$0x1]
  %711 = vset.pattern.permute.xlu0 1
  %712 = vperm.xlu0 %711, %v692
  %v713 = vpop.permute.xlu0 %712
  %715 = vset.pattern.permute.xlu0 1
  %716 = vperm.xlu0 %715, %v693
  %v717 = vpop.permute.xlu0 %716
  %v719 = vperm.slane %v710, 0
  %v720 = vmul.f32 %v713, %v719
  %v721 = vmul.f32 %v717, %v719
  %v722 = vadd.f32 %v708, %v720
  %v723 = vadd.f32 %v709, %v721
  %v724 = vld [vmem:[%s7 + $0x2] sm:$0x1]
  %725 = vset.pattern.permute.xlu0 2
  %726 = vperm.xlu0 %725, %v692
  %v727 = vpop.permute.xlu0 %726
  %729 = vset.pattern.permute.xlu0 2
  %730 = vperm.xlu0 %729, %v693
  %v731 = vpop.permute.xlu0 %730
  %v733 = vperm.slane %v724, 0
  %v734 = vmul.f32 %v727, %v733
  %v735 = vmul.f32 %v731, %v733
  %v736 = vadd.f32 %v722, %v734
  %v737 = vadd.f32 %v723, %v735
  %v738 = vld [vmem:[%s7 + $0x3] sm:$0x1]
  %739 = vset.pattern.permute.xlu0 3
  %740 = vperm.xlu0 %739, %v692
  %v741 = vpop.permute.xlu0 %740
  %743 = vset.pattern.permute.xlu0 3
  %744 = vperm.xlu0 %743, %v693
  %v745 = vpop.permute.xlu0 %744
  %v747 = vperm.slane %v738, 0
  %v748 = vmul.f32 %v741, %v747
  %v749 = vmul.f32 %v745, %v747
  %v750 = vadd.f32 %v736, %v748
  %v751 = vadd.f32 %v737, %v749
  %v752 = vld [vmem:[%s7 + $0x4] sm:$0x1]
  %753 = vset.pattern.permute.xlu0 4
  %754 = vperm.xlu0 %753, %v692
  %v755 = vpop.permute.xlu0 %754
  %757 = vset.pattern.permute.xlu0 4
  %758 = vperm.xlu0 %757, %v693
  %v759 = vpop.permute.xlu0 %758
  %v761 = vperm.slane %v752, 0
  %v762 = vmul.f32 %v755, %v761
  %v763 = vmul.f32 %v759, %v761
  %v764 = vadd.f32 %v750, %v762
  %v765 = vadd.f32 %v751, %v763
  %v766 = vld [vmem:[%s7 + $0x5] sm:$0x1]
  %767 = vset.pattern.permute.xlu0 5
  %768 = vperm.xlu0 %767, %v692
  %v769 = vpop.permute.xlu0 %768
  %771 = vset.pattern.permute.xlu0 5
  %772 = vperm.xlu0 %771, %v693
  %v773 = vpop.permute.xlu0 %772
  %v775 = vperm.slane %v766, 0
  %v776 = vmul.f32 %v769, %v775
  %v777 = vmul.f32 %v773, %v775
  %v778 = vadd.f32 %v764, %v776
  %v779 = vadd.f32 %v765, %v777
  %v780 = vld [vmem:[%s7 + $0x6] sm:$0x1]
  %781 = vset.pattern.permute.xlu0 6
  %782 = vperm.xlu0 %781, %v692
  %v783 = vpop.permute.xlu0 %782
  %785 = vset.pattern.permute.xlu0 6
  %786 = vperm.xlu0 %785, %v693
  %v787 = vpop.permute.xlu0 %786
  %v789 = vperm.slane %v780, 0
  %v790 = vmul.f32 %v783, %v789
  %v791 = vmul.f32 %v787, %v789
  %v792 = vadd.f32 %v778, %v790
  %v793 = vadd.f32 %v779, %v791
  %v794 = vld [vmem:[%s7 + $0x7] sm:$0x1]
  %795 = vset.pattern.permute.xlu0 7
  %796 = vperm.xlu0 %795, %v692
  %v797 = vpop.permute.xlu0 %796
  %799 = vset.pattern.permute.xlu0 7
  %800 = vperm.xlu0 %799, %v693
  %v801 = vpop.permute.xlu0 %800
  %v803 = vperm.slane %v794, 0
  %v804 = vmul.f32 %v797, %v803
  %v805 = vmul.f32 %v801, %v803
  %v806 = vadd.f32 %v792, %v804
  %v807 = vadd.f32 %v793, %v805
  %v808 = vld [vmem:[#allocation2 + $0x1] sm:$0xf]
  %v809 = vld [vmem:[#allocation2 + $0x19] sm:$0xf]
  %v810 = vld [vmem:[%s7 + $0x8] sm:$0x1]
  %812 = vset.pattern.permute.xlu0 0
  %813 = vperm.xlu0 %812, %v808
  %v814 = vpop.permute.xlu0 %813
  %817 = vset.pattern.permute.xlu0 0
  %818 = vperm.xlu0 %817, %v809
  %v819 = vpop.permute.xlu0 %818
  %v821 = vperm.slane %v810, 0
  %v822 = vmul.f32 %v814, %v821
  %v823 = vmul.f32 %v819, %v821
  %v824 = vadd.f32 %v806, %v822
  %v825 = vadd.f32 %v807, %v823
  %v826 = vld [vmem:[%s7 + $0x9] sm:$0x1]
  %827 = vset.pattern.permute.xlu0 1
  %828 = vperm.xlu0 %827, %v808
  %v829 = vpop.permute.xlu0 %828
  %831 = vset.pattern.permute.xlu0 1
  %832 = vperm.xlu0 %831, %v809
  %v833 = vpop.permute.xlu0 %832
  %v835 = vperm.slane %v826, 0
  %v836 = vmul.f32 %v829, %v835
  %v837 = vmul.f32 %v833, %v835
  %v838 = vadd.f32 %v824, %v836
  %v839 = vadd.f32 %v825, %v837
  %v840 = vld [vmem:[%s7 + $0xa] sm:$0x1]
  %841 = vset.pattern.permute.xlu0 2
  %842 = vperm.xlu0 %841, %v808
  %v843 = vpop.permute.xlu0 %842
  %845 = vset.pattern.permute.xlu0 2
  %846 = vperm.xlu0 %845, %v809
  %v847 = vpop.permute.xlu0 %846
  %v849 = vperm.slane %v840, 0
  %v850 = vmul.f32 %v843, %v849
  %v851 = vmul.f32 %v847, %v849
  %v852 = vadd.f32 %v838, %v850
  %v853 = vadd.f32 %v839, %v851
  %v854 = vld [vmem:[%s7 + $0xb] sm:$0x1]
  %855 = vset.pattern.permute.xlu0 3
  %856 = vperm.xlu0 %855, %v808
  %v857 = vpop.permute.xlu0 %856
  %859 = vset.pattern.permute.xlu0 3
  %860 = vperm.xlu0 %859, %v809
  %v861 = vpop.permute.xlu0 %860
  %v863 = vperm.slane %v854, 0
  %v864 = vmul.f32 %v857, %v863
  %v865 = vmul.f32 %v861, %v863
  %v866 = vadd.f32 %v852, %v864
  %v867 = vadd.f32 %v853, %v865
  %v868 = vld [vmem:[%s7 + $0xc] sm:$0x1]
  %869 = vset.pattern.permute.xlu0 4
  %870 = vperm.xlu0 %869, %v808
  %v871 = vpop.permute.xlu0 %870
  %873 = vset.pattern.permute.xlu0 4
  %874 = vperm.xlu0 %873, %v809
  %v875 = vpop.permute.xlu0 %874
  %v877 = vperm.slane %v868, 0
  %v878 = vmul.f32 %v871, %v877
  %v879 = vmul.f32 %v875, %v877
  %v880 = vadd.f32 %v866, %v878
  %v881 = vadd.f32 %v867, %v879
  %v882 = vld [vmem:[%s7 + $0xd] sm:$0x1]
  %883 = vset.pattern.permute.xlu0 5
  %884 = vperm.xlu0 %883, %v808
  %v885 = vpop.permute.xlu0 %884
  %887 = vset.pattern.permute.xlu0 5
  %888 = vperm.xlu0 %887, %v809
  %v889 = vpop.permute.xlu0 %888
  %v891 = vperm.slane %v882, 0
  %v892 = vmul.f32 %v885, %v891
  %v893 = vmul.f32 %v889, %v891
  %v894 = vadd.f32 %v880, %v892
  %v895 = vadd.f32 %v881, %v893
  %v896 = vld [vmem:[%s7 + $0xe] sm:$0x1]
  %897 = vset.pattern.permute.xlu0 6
  %898 = vperm.xlu0 %897, %v808
  %v899 = vpop.permute.xlu0 %898
  %901 = vset.pattern.permute.xlu0 6
  %902 = vperm.xlu0 %901, %v809
  %v903 = vpop.permute.xlu0 %902
  %v905 = vperm.slane %v896, 0
  %v906 = vmul.f32 %v899, %v905
  %v907 = vmul.f32 %v903, %v905
  %v908 = vadd.f32 %v894, %v906
  %v909 = vadd.f32 %v895, %v907
  %v910 = vld [vmem:[%s7 + $0xf] sm:$0x1]
  %911 = vset.pattern.permute.xlu0 7
  %912 = vperm.xlu0 %911, %v808
  %v913 = vpop.permute.xlu0 %912
  %915 = vset.pattern.permute.xlu0 7
  %916 = vperm.xlu0 %915, %v809
  %v917 = vpop.permute.xlu0 %916
  %v919 = vperm.slane %v910, 0
  %v920 = vmul.f32 %v913, %v919
  %v921 = vmul.f32 %v917, %v919
  %v922 = vadd.f32 %v908, %v920
  %v923 = vadd.f32 %v909, %v921
  %v924 = vld [vmem:[#allocation2 + $0x2] sm:$0xf]
  %v925 = vld [vmem:[#allocation2 + $0x1a] sm:$0xf]
  %v926 = vld [vmem:[%s7 + $0x10] sm:$0x1]
  %928 = vset.pattern.permute.xlu0 0
  %929 = vperm.xlu0 %928, %v924
  %v930 = vpop.permute.xlu0 %929
  %933 = vset.pattern.permute.xlu0 0
  %934 = vperm.xlu0 %933, %v925
  %v935 = vpop.permute.xlu0 %934
  %v937 = vperm.slane %v926, 0
  %v938 = vmul.f32 %v930, %v937
  %v939 = vmul.f32 %v935, %v937
  %v940 = vadd.f32 %v922, %v938
  %v941 = vadd.f32 %v923, %v939
  %v942 = vld [vmem:[%s7 + $0x11] sm:$0x1]
  %943 = vset.pattern.permute.xlu0 1
  %944 = vperm.xlu0 %943, %v924
  %v945 = vpop.permute.xlu0 %944
  %947 = vset.pattern.permute.xlu0 1
  %948 = vperm.xlu0 %947, %v925
  %v949 = vpop.permute.xlu0 %948
  %v951 = vperm.slane %v942, 0
  %v952 = vmul.f32 %v945, %v951
  %v953 = vmul.f32 %v949, %v951
  %v954 = vadd.f32 %v940, %v952
  %v955 = vadd.f32 %v941, %v953
  %v956 = vld [vmem:[%s7 + $0x12] sm:$0x1]
  %957 = vset.pattern.permute.xlu0 2
  %958 = vperm.xlu0 %957, %v924
  %v959 = vpop.permute.xlu0 %958
  %961 = vset.pattern.permute.xlu0 2
  %962 = vperm.xlu0 %961, %v925
  %v963 = vpop.permute.xlu0 %962
  %v965 = vperm.slane %v956, 0
  %v966 = vmul.f32 %v959, %v965
  %v967 = vmul.f32 %v963, %v965
  %v968 = vadd.f32 %v954, %v966
  %v969 = vadd.f32 %v955, %v967
  %v970 = vld [vmem:[%s7 + $0x13] sm:$0x1]
  %971 = vset.pattern.permute.xlu0 3
  %972 = vperm.xlu0 %971, %v924
  %v973 = vpop.permute.xlu0 %972
  %975 = vset.pattern.permute.xlu0 3
  %976 = vperm.xlu0 %975, %v925
  %v977 = vpop.permute.xlu0 %976
  %v979 = vperm.slane %v970, 0
  %v980 = vmul.f32 %v973, %v979
  %v981 = vmul.f32 %v977, %v979
  %v982 = vadd.f32 %v968, %v980
  %v983 = vadd.f32 %v969, %v981
  %v984 = vld [vmem:[%s7 + $0x14] sm:$0x1]
  %985 = vset.pattern.permute.xlu0 4
  %986 = vperm.xlu0 %985, %v924
  %v987 = vpop.permute.xlu0 %986
  %989 = vset.pattern.permute.xlu0 4
  %990 = vperm.xlu0 %989, %v925
  %v991 = vpop.permute.xlu0 %990
  %v993 = vperm.slane %v984, 0
  %v994 = vmul.f32 %v987, %v993
  %v995 = vmul.f32 %v991, %v993
  %v996 = vadd.f32 %v982, %v994
  %v997 = vadd.f32 %v983, %v995
  %v998 = vld [vmem:[%s7 + $0x15] sm:$0x1]
  %999 = vset.pattern.permute.xlu0 5
  %1000 = vperm.xlu0 %999, %v924
  %v1001 = vpop.permute.xlu0 %1000
  %1003 = vset.pattern.permute.xlu0 5
  %1004 = vperm.xlu0 %1003, %v925
  %v1005 = vpop.permute.xlu0 %1004
  %v1007 = vperm.slane %v998, 0
  %v1008 = vmul.f32 %v1001, %v1007
  %v1009 = vmul.f32 %v1005, %v1007
  %v1010 = vadd.f32 %v996, %v1008
  %v1011 = vadd.f32 %v997, %v1009
  %v1012 = vld [vmem:[%s7 + $0x16] sm:$0x1]
  %1013 = vset.pattern.permute.xlu0 6
  %1014 = vperm.xlu0 %1013, %v924
  %v1015 = vpop.permute.xlu0 %1014
  %1017 = vset.pattern.permute.xlu0 6
  %1018 = vperm.xlu0 %1017, %v925
  %v1019 = vpop.permute.xlu0 %1018
  %v1021 = vperm.slane %v1012, 0
  %v1022 = vmul.f32 %v1015, %v1021
  %v1023 = vmul.f32 %v1019, %v1021
  %v1024 = vadd.f32 %v1010, %v1022
  %v1025 = vadd.f32 %v1011, %v1023
  %v1026 = vld [vmem:[%s7 + $0x17] sm:$0x1]
  %1027 = vset.pattern.permute.xlu0 7
  %1028 = vperm.xlu0 %1027, %v924
  %v1029 = vpop.permute.xlu0 %1028
  %1031 = vset.pattern.permute.xlu0 7
  %1032 = vperm.xlu0 %1031, %v925
  %v1033 = vpop.permute.xlu0 %1032
  %v1035 = vperm.slane %v1026, 0
  %v1036 = vmul.f32 %v1029, %v1035
  %v1037 = vmul.f32 %v1033, %v1035
  %v1038 = vadd.f32 %v1024, %v1036
  %v1039 = vadd.f32 %v1025, %v1037
  %vm1040 = vcmask 44032
  %v1041 = vsel %vm1040, %v1038, 0.0
  %v1042 = vrot.slane %v1041, 4
  %v1043 = vadd.f32 %v1041, %v1042
  %v1044 = vrot.slane %v1043, 2
  %v1045 = vadd.f32 %v1043, %v1044
  %v1046 = vrot.slane %v1045, 1
  %v1047 = vadd.f32 %v1045, %v1046
  %v1048 = vsel %vm1040, %v1039, 0.0
  %v1049 = vrot.slane %v1048, 4
  %v1050 = vadd.f32 %v1048, %v1049
  %v1051 = vrot.slane %v1050, 2
  %v1052 = vadd.f32 %v1050, %v1051
  %v1053 = vrot.slane %v1052, 1
  %v1054 = vadd.f32 %v1052, %v1053
  %v1055 = vmul.f32 %v1038, %v1038
  %v1056 = vmul.f32 %v1039, %v1039
  %v1057 = vsel %vm1040, %v1055, 0.0
  %v1058 = vrot.slane %v1057, 4
  %v1059 = vadd.f32 %v1057, %v1058
  %v1060 = vrot.slane %v1059, 2
  %v1061 = vadd.f32 %v1059, %v1060
  %v1062 = vrot.slane %v1061, 1
  %v1063 = vadd.f32 %v1061, %v1062
  %v1064 = vsel %vm1040, %v1056, 0.0
  %v1065 = vrot.slane %v1064, 4
  %v1066 = vadd.f32 %v1064, %v1065
  %v1067 = vrot.slane %v1066, 2
  %v1068 = vadd.f32 %v1066, %v1067
  %v1069 = vrot.slane %v1068, 1
  %v1070 = vadd.f32 %v1068, %v1069
  %v1071 = vadd.f32 %v1047, %v1054
  %v1072 = vadd.f32 %v1063, %v1070
  %v1073 = vmul.f32 %v1071, 0.125
  %v1074 = vmul.f32 %v1072, 0.125
  %v1075 = vmul.f32 %v1073, %v1073
  %v1076 = vsub.f32 %v1074, %v1075
  %v1077 = vld [vmem:[%s8] sm:$0x1]
  %v1078 = vadd.f32 %v1076, 1e-05
  %v1079 = vrsqrt.pop %v1078
  %v1080 = vmul.f32 %v1079, %v1078
  %v1081 = vmul.f32 %v1080, %v1079
  %v1082 = vmul.f32 0.5, %v1081
  %v1083 = vsub.f32 1.5, %v1082
  %v1084 = vmul.f32 %v1079, %v1083
  %vm1085 = vweird.f32 %v1078
  %vm1086 = vweird.f32 %v1079
  %vm1087 = vmor %vm1085, %vm1086
  %v1088 = vsel %vm1087, %v1079, %v1084
  %v1089 = vmul.f32 %v1077, %v1088
  %v1090 = vld [vmem:[%s9] sm:$0x1]
  %v1091 = vmul.f32 %v1073, %v1089
  %v1092 = vsub.f32 %v1090, %v1091
  %v1094 = vperm.slane %v1089, 0
  %v1096 = vmul.f32 %v1038, %v1094
  %v1097 = vmul.f32 %v1039, %v1094
  %v1099 = vperm.slane %v1092, 0
  %v1101 = vadd.f32 %v1096, %v1099
  %v1102 = vadd.f32 %v1097, %v1099
  %v1103 = vmax.f32 %v1101, 0.0
  %v1104 = vmax.f32 %v1102, 0.0
  %1105 = vst.msk [vmem:[#allocation2 + $0x1] sm:$0xf] %vm1040, %v1103
  %1106 = vst.msk [vmem:[#allocation2 + $0x19] sm:$0xf] %vm1040, %v1104
  %v1107 = vld [vmem:[#allocation2] ss:$2 sm:$0x3]
  %v1108 = vld [vmem:[%s245] ss:$2 sm:$0x3]
  %v1109 = vld [vmem:[%s247] ss:$2 sm:$0x3]
  %v1110 = vld [vmem:[%s249] ss:$2 sm:$0x3]
  %v1111 = vld [vmem:[%s251] ss:$2 sm:$0x3]
  %v1112 = vld [vmem:[%s253] ss:$2 sm:$0x3]
  %v1113 = vmax.f32 %v1107, %v1109
  %v1114 = vmax.f32 %v1108, %v1110
  %v1115 = vmax.f32 %v1113, %v1111
  %v1116 = vmax.f32 %v1114, %v1112
  %vm1117 = vcmask 41984
  %v1118 = vsel %vm1117, %v1115, 0.0
  %v1119 = vrot.slane %v1118, 4
  %v1120 = vadd.f32 %v1118, %v1119
  %v1121 = vrot.slane %v1120, 2
  %v1122 = vadd.f32 %v1120, %v1121
  %v1123 = vrot.slane %v1122, 1
  %v1124 = vadd.f32 %v1122, %v1123
  %v1125 = vsel %vm1117, %v1116, 0.0
  %v1126 = vrot.slane %v1125, 4
  %v1127 = vadd.f32 %v1125, %v1126
  %v1128 = vrot.slane %v1127, 2
  %v1129 = vadd.f32 %v1127, %v1128
  %v1130 = vrot.slane %v1129, 1
  %v1131 = vadd.f32 %v1129, %v1130
  %v1132 = vmul.f32 %v1124, 0.5
  %v1133 = vmul.f32 %v1131, 0.5
  %v1134 = vld [vmem:[%s10] sm:$0x1]
  %v1135 = vld [vmem:[#allocation3] sm:$0x1]
  %v1136 = vmul.f32 %v1132, %v1134
  %v1137 = vmul.f32 %v1133, %v1134
  %vm1138 = vcmask 40960
  %v1139 = vsel %vm1138, %v1136, 0.0
  %1140 = vadd.xlane.f32.xlu0 %v1139
  %v1141 = vpop.xlane.xlu0 %1140
  %v1142 = vsel %vm1138, %v1137, 0.0
  %1143 = vadd.xlane.f32.xlu0 %v1142
  %v1144 = vpop.xlane.xlu0 %1143
  %v1145 = vadd.f32 %v1141, %v1135
  %v1146 = vadd.f32 %v1144, %v1135
  %vm1147 = vcmask 0
  %1148 = vst.msk [vmem:[%s12] sm:$0x1] %vm1147, %v1145
  %1149 = vst.msk [vmem:[%s12 + $0x1] sm:$0x1] %vm1147, %v1146
  // Predicated region
  $region50: #{tpu_custom_call.1} parent=0 // pred_check
    _
  $region51: #{tpu_custom_call.1} parent=0 // pred_check_branch
    %1151 = sbr.rel (0) target = $region53
  $region52: #{tpu_custom_call.1} parent=0 // pred_region
    _
  $region53: #{tpu_custom_call.1} parent=0 // pred_fallthru
    _
  // Predicated region
  $region54: #{tpu_custom_call.1} parent=0 // pred_check
    _
  $region55: #{tpu_custom_call.1} parent=0 // pred_check_branch
    %1153 = sbr.rel (0) target = $region57
  $region56: #{tpu_custom_call.1} parent=0 // pred_region
    _
  $region57: #{tpu_custom_call.1} parent=0 // pred_fallthru
    _

</llo_original>
